<compile_context>
chip_gen: v7x
topology: tpu7x:2x2x1
jax: 0.10.0
libtpu: 0.0.40
codegen_flags: <defaults>
</compile_context>

<pallas_src>
import functools

import jax
import jax.numpy as jnp
from jax.experimental import pallas as pl
from jax.experimental.pallas import tpu as pltpu

LANE = 128


def _round_up(x, m):
    return (x + m - 1) // m * m


def lstm_tagger_kernel(ids_ref, emb_ref, w_ih_ref, w_hh_ref, b_ref,
                       w_tag_ref, b_tag_ref, out_ref, gx_ref):
    """Whole LSTM-tagger forward in one invocation.

    ids_ref    : (S,)        int32 token ids (SMEM, scalar-prefetched)
    emb_ref    : (V, E_pad)  f32 padded embedding table
    w_ih_ref   : (E_pad, 4H) bf16 weight_ih_l0.T, gate columns [i, f, o, g]
    w_hh_ref   : (H, 4H)     bf16 weight_hh_l0.T, gate columns [i, f, o, g]
    b_ref      : (1, 4H)     f32  b_ih + b_hh, gate columns [i, f, o, g]
    w_tag_ref  : (H, T_pad)  bf16 hidden2tag.weight.T, zero-padded columns
    b_tag_ref  : (1, T_pad)  f32  hidden2tag.bias, -1e30 in padded columns
    out_ref    : (S, T_pad)  f32  log_softmax(tag_space); padded cols garbage
    gx_ref     : (S, 4H)     f32  VMEM scratch: hoisted input projection
    """
    seq_len = out_ref.shape[0]
    H = w_hh_ref.shape[0]

    # 0) Embedding gather inside the kernel (dynamic row slices, ids in SMEM).
    rows = [emb_ref[pl.ds(ids_ref[t], 1), :] for t in range(seq_len)]
    embeds = jnp.concatenate(rows, axis=0)                    # (S, E_pad) f32

    # 1) Input projection hoisted out of the recurrence: one batched matmul,
    #    parked in a VMEM scratch so it is not held live across the loop.
    gx_ref[...] = (jnp.dot(embeds.astype(jnp.bfloat16), w_ih_ref[...],
                           preferred_element_type=jnp.float32)
                   + b_ref[...])                              # (S, 4H) f32

    # 2) Serial recurrence, fully unrolled (static trip count).  The recurrent
    #    weight is read from VMEM at each dot (no 32/64-vreg hoisted value).
    h = jnp.zeros((1, H), jnp.float32)
    c = jnp.zeros((1, H), jnp.float32)
    h_rows = []
    for t in range(seq_len):
        g = (gx_ref[t:t + 1, :]
             + jnp.dot(h.astype(jnp.bfloat16), w_hh_ref[...],
                       preferred_element_type=jnp.float32))   # (1, 4H) f32
        sig = jax.nn.sigmoid(g[:, 0:3 * H])       # contiguous [i|f|o] slice
        g_g = jnp.tanh(g[:, 3 * H:4 * H])
        i_g = sig[:, 0:H]
        f_g = sig[:, H:2 * H]
        o_g = sig[:, 2 * H:3 * H]
        c = f_g * c + i_g * g_g
        h = o_g * jnp.tanh(c)
        h_rows.append(h)                          # stays in registers

    # 3) hidden2tag + log_softmax once, batched over the whole sequence.
    h_all = jnp.concatenate(h_rows, axis=0)                   # (S, H) f32
    tag = (jnp.dot(h_all.astype(jnp.bfloat16), w_tag_ref[...],
                   preferred_element_type=jnp.float32)
           + b_tag_ref[...])                                  # (S, T_pad)
    m = jnp.max(tag, axis=-1, keepdims=True)
    shifted = tag - m
    lse = jnp.log(jnp.sum(jnp.exp(shifted), axis=-1, keepdims=True))
    out_ref[...] = shifted - lse                  # single lane-dense store


def prepare_params(w_ih, w_hh, b_ih, b_hh, w_tag, b_tag):
    """One-time (model-load-time) transposes, gate reorder, bf16, padding."""
    four_h, E = w_ih.shape
    H = four_h // 4
    T = w_tag.shape[0]
    e_pad = _round_up(E, LANE)
    t_pad = _round_up(T, LANE)

    def reorder(m):  # gate columns [i, f, g, o] -> [i, f, o, g]
        return jnp.concatenate(
            [m[:, 0:2 * H], m[:, 3 * H:4 * H], m[:, 2 * H:3 * H]], axis=1)

    w_ih_t = jnp.zeros((e_pad, four_h), jnp.float32).at[:E, :].set(w_ih.T)
    w_ih_t = reorder(w_ih_t).astype(jnp.bfloat16)                 # (E_pad, 4H)
    w_hh_t = reorder(jnp.asarray(w_hh.T, jnp.float32)).astype(jnp.bfloat16)
    bias = reorder((b_ih + b_hh).astype(jnp.float32)[None, :])    # (1, 4H) f32
    w_tag_t = (jnp.zeros((H, t_pad), jnp.float32)
               .at[:, :T].set(w_tag.T).astype(jnp.bfloat16))      # (H, T_pad)
    # Padded tag columns get -1e30 bias so they never win max / add to sum.
    b_tag_p = jnp.full((1, t_pad), -1e30, jnp.float32).at[0, :T].set(b_tag)
    return w_ih_t, w_hh_t, bias, w_tag_t, b_tag_p


@functools.partial(jax.jit, static_argnames=("tagset_size",))
def lstm_tagger_forward(token_ids, emb_table_pad, w_ih_t, w_hh_t, bias,
                        w_tag_t, b_tag_p, *, tagset_size):
    seq_len = token_ids.shape[0]
    hidden_dim = w_hh_t.shape[0]
    t_pad = w_tag_t.shape[1]

    full = lambda i, ids: (0, 0)      # index_maps receive the prefetch ref
    grid_spec = pltpu.PrefetchScalarGridSpec(
        num_scalar_prefetch=1,                    # token ids -> SMEM
        grid=(1,),                                # single invocation
        in_specs=[
            pl.BlockSpec(emb_table_pad.shape, full),
            pl.BlockSpec(w_ih_t.shape, full),
            pl.BlockSpec(w_hh_t.shape, full),
            pl.BlockSpec(bias.shape, full),
            pl.BlockSpec(w_tag_t.shape, full),
            pl.BlockSpec(b_tag_p.shape, full),
        ],
        out_specs=pl.BlockSpec((seq_len, t_pad), full),
        scratch_shapes=[
            pltpu.VMEM((seq_len, 4 * hidden_dim), jnp.float32),  # gates_x
        ],
    )

    out_padded = pl.pallas_call(
        lstm_tagger_kernel,
        out_shape=jax.ShapeDtypeStruct((seq_len, t_pad), jnp.float32),
        grid_spec=grid_spec,
        compiler_params=pltpu.CompilerParams(
            dimension_semantics=("arbitrary",),   # serial recurrence
            vmem_limit_bytes=8 * 1024 * 1024),
    )(token_ids, emb_table_pad, w_ih_t, w_hh_t, bias, w_tag_t, b_tag_p)

    return out_padded[:, :tagset_size]


def reference_forward(embeds, w_ih, w_hh, b_ih, b_hh, w_tag, b_tag):
    """Pure-JAX reference matching torch.nn.LSTM + Linear + log_softmax."""
    H = w_hh.shape[1]

    def step(carry, x):
        h, c = carry
        gates = x @ w_ih.T + b_ih + h @ w_hh.T + b_hh
        i, f, g, o = jnp.split(gates, 4)
        i, f, o = jax.nn.sigmoid(i), jax.nn.sigmoid(f), jax.nn.sigmoid(o)
        g = jnp.tanh(g)
        c = f * c + i * g
        h = o * jnp.tanh(c)
        return (h, c), h

    (_, _), hs = jax.lax.scan(step, (jnp.zeros(H), jnp.zeros(H)), embeds)
    tag = hs @ w_tag.T + b_tag
    return jax.nn.log_softmax(tag, axis=-1)


if __name__ == "__main__":
    # Dimensions from the original script (kept small): E=100, H=128, T=36.
    VOCAB_SIZE = 40
    EMBEDDING_DIM = 100
    HIDDEN_DIM = 128
    TAGSET_SIZE = 36
    SEQ_LEN = 8

    key = jax.random.PRNGKey(0)
    ks = jax.random.split(key, 8)
    stdv = 1.0 / jnp.sqrt(HIDDEN_DIM)

    # nn.Embedding: N(0, 1)
    embedding_table = jax.random.normal(ks[0], (VOCAB_SIZE, EMBEDDING_DIM),
                                        jnp.float32)
    # nn.LSTM params: U(-1/sqrt(H), 1/sqrt(H)), gate order [i, f, g, o]
    w_ih = jax.random.uniform(ks[1], (4 * HIDDEN_DIM, EMBEDDING_DIM),
                              jnp.float32, -stdv, stdv)
    w_hh = jax.random.uniform(ks[2], (4 * HIDDEN_DIM, HIDDEN_DIM),
                              jnp.float32, -stdv, stdv)
    b_ih = jax.random.uniform(ks[3], (4 * HIDDEN_DIM,), jnp.float32,
                              -stdv, stdv)
    b_hh = jax.random.uniform(ks[4], (4 * HIDDEN_DIM,), jnp.float32,
                              -stdv, stdv)
    # nn.Linear(hidden_dim, tagset_size)
    w_tag = jax.random.uniform(ks[5], (TAGSET_SIZE, HIDDEN_DIM), jnp.float32,
                               -stdv, stdv)
    b_tag = jax.random.uniform(ks[6], (TAGSET_SIZE,), jnp.float32,
                               -stdv, stdv)

    # prepare_sequence -> integer token ids
    sentence = jax.random.randint(ks[7], (SEQ_LEN,), 0, VOCAB_SIZE, jnp.int32)

    # Model-load-time prep: transposed / gate-reordered / bf16 weights and a
    # lane-padded f32 embedding table (rows already 128-lane aligned).
    E_PAD = _round_up(EMBEDDING_DIM, LANE)
    params = prepare_params(w_ih, w_hh, b_ih, b_hh, w_tag, b_tag)
    emb_table_pad = jnp.zeros((VOCAB_SIZE, E_PAD), jnp.float32)
    emb_table_pad = emb_table_pad.at[:, :EMBEDDING_DIM].set(embedding_table)

    tag_scores = lstm_tagger_forward(sentence, emb_table_pad, *params,
                                     tagset_size=TAGSET_SIZE)
    tag_scores = jax.block_until_ready(tag_scores)

    embeds = jnp.take(embedding_table, sentence, axis=0)     # unpadded, ref
    ref = reference_forward(embeds, w_ih, w_hh, b_ih, b_hh, w_tag, b_tag)
    assert tag_scores.shape == (SEQ_LEN, TAGSET_SIZE)
    # bf16 weights (MXU operands only; f32 accumulation / elementwise) loosen
    # the tolerance slightly vs a pure-f32 reference.
    assert jnp.allclose(tag_scores, ref, rtol=2e-2, atol=2e-2), (
        "mismatch vs pure-JAX reference")

    print("KERNEL_OK")
</pallas_src>

<mosaic_0001>
module attributes {stable_mosaic.version = 11 : i64} {
  func.func @lstm_tagger_kernel(%arg0: i32, %arg1: memref<8xi32, #tpu.memory_space<smem>>, %arg2: memref<40x128xf32, #tpu.memory_space<vmem>>, %arg3: memref<128x512xbf16, #tpu.memory_space<vmem>>, %arg4: memref<128x512xbf16, #tpu.memory_space<vmem>>, %arg5: memref<1x512xf32, #tpu.memory_space<vmem>>, %arg6: memref<128x128xbf16, #tpu.memory_space<vmem>>, %arg7: memref<1x128xf32, #tpu.memory_space<vmem>>, %arg8: memref<8x128xf32, #tpu.memory_space<vmem>>, %arg9: memref<8x512xf32, #tpu.memory_space<vmem>>) attributes {dimension_semantics = [#tpu.dimension_semantics<arbitrary>], iteration_bounds = array<i64: 1>, scalar_prefetch = 1 : i64, scratch_operands = 1 : i64, tpu.core_type = #tpu.core_type<tc>, window_params = [{pipeline_mode = #tpu.pipeline_mode<synchronous>, transform_indices = @transform_0, window_bounds = array<i64: 40, 128>}, {pipeline_mode = #tpu.pipeline_mode<synchronous>, transform_indices = @transform_1, window_bounds = array<i64: 128, 512>}, {pipeline_mode = #tpu.pipeline_mode<synchronous>, transform_indices = @transform_2, window_bounds = array<i64: 128, 512>}, {pipeline_mode = #tpu.pipeline_mode<synchronous>, transform_indices = @transform_3, window_bounds = array<i64: 1, 512>}, {pipeline_mode = #tpu.pipeline_mode<synchronous>, transform_indices = @transform_4, window_bounds = array<i64: 128, 128>}, {pipeline_mode = #tpu.pipeline_mode<synchronous>, transform_indices = @transform_5, window_bounds = array<i64: 1, 128>}, {pipeline_mode = #tpu.pipeline_mode<synchronous>, transform_indices = @transform_6, window_bounds = array<i64: 8, 128>}]} {
    %c0 = arith.constant 0 : index
    %0 = memref.load %arg1[%c0] : memref<8xi32, #tpu.memory_space<smem>>
    %1 = arith.index_cast %0 : i32 to index
    %c0_0 = arith.constant 0 : index
    %2 = vector.load %arg2[%1, %c0_0] : memref<40x128xf32, #tpu.memory_space<vmem>>, vector<1x128xf32>
    %c1 = arith.constant 1 : index
    %3 = memref.load %arg1[%c1] : memref<8xi32, #tpu.memory_space<smem>>
    %4 = arith.index_cast %3 : i32 to index
    %c0_1 = arith.constant 0 : index
    %5 = vector.load %arg2[%4, %c0_1] : memref<40x128xf32, #tpu.memory_space<vmem>>, vector<1x128xf32>
    %c2 = arith.constant 2 : index
    %6 = memref.load %arg1[%c2] : memref<8xi32, #tpu.memory_space<smem>>
    %7 = arith.index_cast %6 : i32 to index
    %c0_2 = arith.constant 0 : index
    %8 = vector.load %arg2[%7, %c0_2] : memref<40x128xf32, #tpu.memory_space<vmem>>, vector<1x128xf32>
    %c3 = arith.constant 3 : index
    %9 = memref.load %arg1[%c3] : memref<8xi32, #tpu.memory_space<smem>>
    %10 = arith.index_cast %9 : i32 to index
    %c0_3 = arith.constant 0 : index
    %11 = vector.load %arg2[%10, %c0_3] : memref<40x128xf32, #tpu.memory_space<vmem>>, vector<1x128xf32>
    %c4 = arith.constant 4 : index
    %12 = memref.load %arg1[%c4] : memref<8xi32, #tpu.memory_space<smem>>
    %13 = arith.index_cast %12 : i32 to index
    %c0_4 = arith.constant 0 : index
    %14 = vector.load %arg2[%13, %c0_4] : memref<40x128xf32, #tpu.memory_space<vmem>>, vector<1x128xf32>
    %c5 = arith.constant 5 : index
    %15 = memref.load %arg1[%c5] : memref<8xi32, #tpu.memory_space<smem>>
    %16 = arith.index_cast %15 : i32 to index
    %c0_5 = arith.constant 0 : index
    %17 = vector.load %arg2[%16, %c0_5] : memref<40x128xf32, #tpu.memory_space<vmem>>, vector<1x128xf32>
    %c6 = arith.constant 6 : index
    %18 = memref.load %arg1[%c6] : memref<8xi32, #tpu.memory_space<smem>>
    %19 = arith.index_cast %18 : i32 to index
    %c0_6 = arith.constant 0 : index
    %20 = vector.load %arg2[%19, %c0_6] : memref<40x128xf32, #tpu.memory_space<vmem>>, vector<1x128xf32>
    %c7 = arith.constant 7 : index
    %21 = memref.load %arg1[%c7] : memref<8xi32, #tpu.memory_space<smem>>
    %22 = arith.index_cast %21 : i32 to index
    %c0_7 = arith.constant 0 : index
    %23 = vector.load %arg2[%22, %c0_7] : memref<40x128xf32, #tpu.memory_space<vmem>>, vector<1x128xf32>
    %24 = tpu.concatenate %2, %5, %8, %11, %14, %17, %20, %23 in 0 : vector<1x128xf32>, vector<1x128xf32>, vector<1x128xf32>, vector<1x128xf32>, vector<1x128xf32>, vector<1x128xf32>, vector<1x128xf32>, vector<1x128xf32> -> vector<8x128xf32>
    %25 = arith.truncf %24 : vector<8x128xf32> to vector<8x128xbf16>
    %c0_8 = arith.constant 0 : index
    %c0_9 = arith.constant 0 : index
    %26 = vector.load %arg3[%c0_8, %c0_9] : memref<128x512xbf16, #tpu.memory_space<vmem>>, vector<128x512xbf16>
    %cst = arith.constant dense<0.000000e+00> : vector<8x512xf32>
    %27 = tpu.matmul %25, %26, %cst {dimension_numbers = #tpu.dot_dimension_numbers<[1], [0], [0], [1], [0, 0, 1, 1], [], []>} : vector<8x128xbf16>, vector<128x512xbf16>, vector<8x512xf32> -> vector<8x512xf32>
    %c0_10 = arith.constant 0 : index
    %c0_11 = arith.constant 0 : index
    %28 = vector.load %arg5[%c0_10, %c0_11] : memref<1x512xf32, #tpu.memory_space<vmem>>, vector<1x512xf32>
    %29 = vector.broadcast %28 : vector<1x512xf32> to vector<8x512xf32>
    %30 = arith.addf %27, %29 : vector<8x512xf32>
    %c0_12 = arith.constant 0 : index
    %c0_13 = arith.constant 0 : index
    %31 = vector.load %arg9[%c0_12, %c0_13] : memref<8x512xf32, #tpu.memory_space<vmem>>, vector<8x512xf32>
    tpu.vector_store %arg9[%c0_12, %c0_13], %30 {strides = array<i32>} : memref<8x512xf32, #tpu.memory_space<vmem>>, vector<8x512xf32>,
    %cst_14 = arith.constant 0.000000e+00 : f32
    %32 = vector.broadcast %cst_14 : f32 to vector<1x128xf32>
    %cst_15 = arith.constant 0.000000e+00 : f32
    %33 = vector.broadcast %cst_15 : f32 to vector<1x128xf32>
    %c0_16 = arith.constant 0 : index
    %c0_17 = arith.constant 0 : index
    %34 = vector.load %arg9[%c0_16, %c0_17] : memref<8x512xf32, #tpu.memory_space<vmem>>, vector<1x512xf32>
    %35 = arith.truncf %32 : vector<1x128xf32> to vector<1x128xbf16>
    %c0_18 = arith.constant 0 : index
    %c0_19 = arith.constant 0 : index
    %36 = vector.load %arg4[%c0_18, %c0_19] : memref<128x512xbf16, #tpu.memory_space<vmem>>, vector<128x512xbf16>
    %cst_20 = arith.constant dense<0.000000e+00> : vector<1x512xf32>
    %37 = tpu.matmul %35, %36, %cst_20 {dimension_numbers = #tpu.dot_dimension_numbers<[1], [0], [0], [1], [0, 0, 1, 1], [], []>} : vector<1x128xbf16>, vector<128x512xbf16>, vector<1x512xf32> -> vector<1x512xf32>
    %38 = arith.addf %34, %37 : vector<1x512xf32>
    %39 = vector.extract_strided_slice %38 {offsets = [0, 0], sizes = [1, 384], strides = [1, 1]} : vector<1x512xf32> to vector<1x384xf32>
    %40 = arith.negf %39 : vector<1x384xf32>
    %41 = math.exp %40 : vector<1x384xf32>
    %cst_21 = arith.constant 1.000000e+00 : f32
    %42 = vector.broadcast %cst_21 : f32 to vector<1x384xf32>
    %43 = arith.addf %42, %41 : vector<1x384xf32>
    %44 = arith.divf %42, %43 : vector<1x384xf32>
    %45 = vector.extract_strided_slice %38 {offsets = [0, 384], sizes = [1, 128], strides = [1, 1]} : vector<1x512xf32> to vector<1x128xf32>
    %46 = math.tanh %45 : vector<1x128xf32>
    %47 = vector.extract_strided_slice %44 {offsets = [0, 0], sizes = [1, 128], strides = [1, 1]} : vector<1x384xf32> to vector<1x128xf32>
    %48 = vector.extract_strided_slice %44 {offsets = [0, 128], sizes = [1, 128], strides = [1, 1]} : vector<1x384xf32> to vector<1x128xf32>
    %49 = vector.extract_strided_slice %44 {offsets = [0, 256], sizes = [1, 128], strides = [1, 1]} : vector<1x384xf32> to vector<1x128xf32>
    %50 = arith.mulf %48, %33 : vector<1x128xf32>
    %51 = arith.mulf %47, %46 : vector<1x128xf32>
    %52 = arith.addf %50, %51 : vector<1x128xf32>
    %53 = math.tanh %52 : vector<1x128xf32>
    %54 = arith.mulf %49, %53 : vector<1x128xf32>
    %c1_22 = arith.constant 1 : index
    %c0_23 = arith.constant 0 : index
    %55 = vector.load %arg9[%c1_22, %c0_23] : memref<8x512xf32, #tpu.memory_space<vmem>>, vector<1x512xf32>
    %56 = arith.truncf %54 : vector<1x128xf32> to vector<1x128xbf16>
    %c0_24 = arith.constant 0 : index
    %c0_25 = arith.constant 0 : index
    %57 = vector.load %arg4[%c0_24, %c0_25] : memref<128x512xbf16, #tpu.memory_space<vmem>>, vector<128x512xbf16>
    %cst_26 = arith.constant dense<0.000000e+00> : vector<1x512xf32>
    %58 = tpu.matmul %56, %57, %cst_26 {dimension_numbers = #tpu.dot_dimension_numbers<[1], [0], [0], [1], [0, 0, 1, 1], [], []>} : vector<1x128xbf16>, vector<128x512xbf16>, vector<1x512xf32> -> vector<1x512xf32>
    %59 = arith.addf %55, %58 : vector<1x512xf32>
    %60 = vector.extract_strided_slice %59 {offsets = [0, 0], sizes = [1, 384], strides = [1, 1]} : vector<1x512xf32> to vector<1x384xf32>
    %61 = arith.negf %60 : vector<1x384xf32>
    %62 = math.exp %61 : vector<1x384xf32>
    %cst_27 = arith.constant 1.000000e+00 : f32
    %63 = vector.broadcast %cst_27 : f32 to vector<1x384xf32>
    %64 = arith.addf %63, %62 : vector<1x384xf32>
    %65 = arith.divf %63, %64 : vector<1x384xf32>
    %66 = vector.extract_strided_slice %59 {offsets = [0, 384], sizes = [1, 128], strides = [1, 1]} : vector<1x512xf32> to vector<1x128xf32>
    %67 = math.tanh %66 : vector<1x128xf32>
    %68 = vector.extract_strided_slice %65 {offsets = [0, 0], sizes = [1, 128], strides = [1, 1]} : vector<1x384xf32> to vector<1x128xf32>
    %69 = vector.extract_strided_slice %65 {offsets = [0, 128], sizes = [1, 128], strides = [1, 1]} : vector<1x384xf32> to vector<1x128xf32>
    %70 = vector.extract_strided_slice %65 {offsets = [0, 256], sizes = [1, 128], strides = [1, 1]} : vector<1x384xf32> to vector<1x128xf32>
    %71 = arith.mulf %69, %52 : vector<1x128xf32>
    %72 = arith.mulf %68, %67 : vector<1x128xf32>
    %73 = arith.addf %71, %72 : vector<1x128xf32>
    %74 = math.tanh %73 : vector<1x128xf32>
    %75 = arith.mulf %70, %74 : vector<1x128xf32>
    %c2_28 = arith.constant 2 : index
    %c0_29 = arith.constant 0 : index
    %76 = vector.load %arg9[%c2_28, %c0_29] : memref<8x512xf32, #tpu.memory_space<vmem>>, vector<1x512xf32>
    %77 = arith.truncf %75 : vector<1x128xf32> to vector<1x128xbf16>
    %c0_30 = arith.constant 0 : index
    %c0_31 = arith.constant 0 : index
    %78 = vector.load %arg4[%c0_30, %c0_31] : memref<128x512xbf16, #tpu.memory_space<vmem>>, vector<128x512xbf16>
    %cst_32 = arith.constant dense<0.000000e+00> : vector<1x512xf32>
    %79 = tpu.matmul %77, %78, %cst_32 {dimension_numbers = #tpu.dot_dimension_numbers<[1], [0], [0], [1], [0, 0, 1, 1], [], []>} : vector<1x128xbf16>, vector<128x512xbf16>, vector<1x512xf32> -> vector<1x512xf32>
    %80 = arith.addf %76, %79 : vector<1x512xf32>
    %81 = vector.extract_strided_slice %80 {offsets = [0, 0], sizes = [1, 384], strides = [1, 1]} : vector<1x512xf32> to vector<1x384xf32>
    %82 = arith.negf %81 : vector<1x384xf32>
    %83 = math.exp %82 : vector<1x384xf32>
    %cst_33 = arith.constant 1.000000e+00 : f32
    %84 = vector.broadcast %cst_33 : f32 to vector<1x384xf32>
    %85 = arith.addf %84, %83 : vector<1x384xf32>
    %86 = arith.divf %84, %85 : vector<1x384xf32>
    %87 = vector.extract_strided_slice %80 {offsets = [0, 384], sizes = [1, 128], strides = [1, 1]} : vector<1x512xf32> to vector<1x128xf32>
    %88 = math.tanh %87 : vector<1x128xf32>
    %89 = vector.extract_strided_slice %86 {offsets = [0, 0], sizes = [1, 128], strides = [1, 1]} : vector<1x384xf32> to vector<1x128xf32>
    %90 = vector.extract_strided_slice %86 {offsets = [0, 128], sizes = [1, 128], strides = [1, 1]} : vector<1x384xf32> to vector<1x128xf32>
    %91 = vector.extract_strided_slice %86 {offsets = [0, 256], sizes = [1, 128], strides = [1, 1]} : vector<1x384xf32> to vector<1x128xf32>
    %92 = arith.mulf %90, %73 : vector<1x128xf32>
    %93 = arith.mulf %89, %88 : vector<1x128xf32>
    %94 = arith.addf %92, %93 : vector<1x128xf32>
    %95 = math.tanh %94 : vector<1x128xf32>
    %96 = arith.mulf %91, %95 : vector<1x128xf32>
    %c3_34 = arith.constant 3 : index
    %c0_35 = arith.constant 0 : index
    %97 = vector.load %arg9[%c3_34, %c0_35] : memref<8x512xf32, #tpu.memory_space<vmem>>, vector<1x512xf32>
    %98 = arith.truncf %96 : vector<1x128xf32> to vector<1x128xbf16>
    %c0_36 = arith.constant 0 : index
    %c0_37 = arith.constant 0 : index
    %99 = vector.load %arg4[%c0_36, %c0_37] : memref<128x512xbf16, #tpu.memory_space<vmem>>, vector<128x512xbf16>
    %cst_38 = arith.constant dense<0.000000e+00> : vector<1x512xf32>
    %100 = tpu.matmul %98, %99, %cst_38 {dimension_numbers = #tpu.dot_dimension_numbers<[1], [0], [0], [1], [0, 0, 1, 1], [], []>} : vector<1x128xbf16>, vector<128x512xbf16>, vector<1x512xf32> -> vector<1x512xf32>
    %101 = arith.addf %97, %100 : vector<1x512xf32>
    %102 = vector.extract_strided_slice %101 {offsets = [0, 0], sizes = [1, 384], strides = [1, 1]} : vector<1x512xf32> to vector<1x384xf32>
    %103 = arith.negf %102 : vector<1x384xf32>
    %104 = math.exp %103 : vector<1x384xf32>
    %cst_39 = arith.constant 1.000000e+00 : f32
    %105 = vector.broadcast %cst_39 : f32 to vector<1x384xf32>
    %106 = arith.addf %105, %104 : vector<1x384xf32>
    %107 = arith.divf %105, %106 : vector<1x384xf32>
    %108 = vector.extract_strided_slice %101 {offsets = [0, 384], sizes = [1, 128], strides = [1, 1]} : vector<1x512xf32> to vector<1x128xf32>
    %109 = math.tanh %108 : vector<1x128xf32>
    %110 = vector.extract_strided_slice %107 {offsets = [0, 0], sizes = [1, 128], strides = [1, 1]} : vector<1x384xf32> to vector<1x128xf32>
    %111 = vector.extract_strided_slice %107 {offsets = [0, 128], sizes = [1, 128], strides = [1, 1]} : vector<1x384xf32> to vector<1x128xf32>
    %112 = vector.extract_strided_slice %107 {offsets = [0, 256], sizes = [1, 128], strides = [1, 1]} : vector<1x384xf32> to vector<1x128xf32>
    %113 = arith.mulf %111, %94 : vector<1x128xf32>
    %114 = arith.mulf %110, %109 : vector<1x128xf32>
    %115 = arith.addf %113, %114 : vector<1x128xf32>
    %116 = math.tanh %115 : vector<1x128xf32>
    %117 = arith.mulf %112, %116 : vector<1x128xf32>
    %c4_40 = arith.constant 4 : index
    %c0_41 = arith.constant 0 : index
    %118 = vector.load %arg9[%c4_40, %c0_41] : memref<8x512xf32, #tpu.memory_space<vmem>>, vector<1x512xf32>
    %119 = arith.truncf %117 : vector<1x128xf32> to vector<1x128xbf16>
    %c0_42 = arith.constant 0 : index
    %c0_43 = arith.constant 0 : index
    %120 = vector.load %arg4[%c0_42, %c0_43] : memref<128x512xbf16, #tpu.memory_space<vmem>>, vector<128x512xbf16>
    %cst_44 = arith.constant dense<0.000000e+00> : vector<1x512xf32>
    %121 = tpu.matmul %119, %120, %cst_44 {dimension_numbers = #tpu.dot_dimension_numbers<[1], [0], [0], [1], [0, 0, 1, 1], [], []>} : vector<1x128xbf16>, vector<128x512xbf16>, vector<1x512xf32> -> vector<1x512xf32>
    %122 = arith.addf %118, %121 : vector<1x512xf32>
    %123 = vector.extract_strided_slice %122 {offsets = [0, 0], sizes = [1, 384], strides = [1, 1]} : vector<1x512xf32> to vector<1x384xf32>
    %124 = arith.negf %123 : vector<1x384xf32>
    %125 = math.exp %124 : vector<1x384xf32>
    %cst_45 = arith.constant 1.000000e+00 : f32
    %126 = vector.broadcast %cst_45 : f32 to vector<1x384xf32>
    %127 = arith.addf %126, %125 : vector<1x384xf32>
    %128 = arith.divf %126, %127 : vector<1x384xf32>
    %129 = vector.extract_strided_slice %122 {offsets = [0, 384], sizes = [1, 128], strides = [1, 1]} : vector<1x512xf32> to vector<1x128xf32>
    %130 = math.tanh %129 : vector<1x128xf32>
    %131 = vector.extract_strided_slice %128 {offsets = [0, 0], sizes = [1, 128], strides = [1, 1]} : vector<1x384xf32> to vector<1x128xf32>
    %132 = vector.extract_strided_slice %128 {offsets = [0, 128], sizes = [1, 128], strides = [1, 1]} : vector<1x384xf32> to vector<1x128xf32>
    %133 = vector.extract_strided_slice %128 {offsets = [0, 256], sizes = [1, 128], strides = [1, 1]} : vector<1x384xf32> to vector<1x128xf32>
    %134 = arith.mulf %132, %115 : vector<1x128xf32>
    %135 = arith.mulf %131, %130 : vector<1x128xf32>
    %136 = arith.addf %134, %135 : vector<1x128xf32>
    %137 = math.tanh %136 : vector<1x128xf32>
    %138 = arith.mulf %133, %137 : vector<1x128xf32>
    %c5_46 = arith.constant 5 : index
    %c0_47 = arith.constant 0 : index
    %139 = vector.load %arg9[%c5_46, %c0_47] : memref<8x512xf32, #tpu.memory_space<vmem>>, vector<1x512xf32>
    %140 = arith.truncf %138 : vector<1x128xf32> to vector<1x128xbf16>
    %c0_48 = arith.constant 0 : index
    %c0_49 = arith.constant 0 : index
    %141 = vector.load %arg4[%c0_48, %c0_49] : memref<128x512xbf16, #tpu.memory_space<vmem>>, vector<128x512xbf16>
    %cst_50 = arith.constant dense<0.000000e+00> : vector<1x512xf32>
    %142 = tpu.matmul %140, %141, %cst_50 {dimension_numbers = #tpu.dot_dimension_numbers<[1], [0], [0], [1], [0, 0, 1, 1], [], []>} : vector<1x128xbf16>, vector<128x512xbf16>, vector<1x512xf32> -> vector<1x512xf32>
    %143 = arith.addf %139, %142 : vector<1x512xf32>
    %144 = vector.extract_strided_slice %143 {offsets = [0, 0], sizes = [1, 384], strides = [1, 1]} : vector<1x512xf32> to vector<1x384xf32>
    %145 = arith.negf %144 : vector<1x384xf32>
    %146 = math.exp %145 : vector<1x384xf32>
    %cst_51 = arith.constant 1.000000e+00 : f32
    %147 = vector.broadcast %cst_51 : f32 to vector<1x384xf32>
    %148 = arith.addf %147, %146 : vector<1x384xf32>
    %149 = arith.divf %147, %148 : vector<1x384xf32>
    %150 = vector.extract_strided_slice %143 {offsets = [0, 384], sizes = [1, 128], strides = [1, 1]} : vector<1x512xf32> to vector<1x128xf32>
    %151 = math.tanh %150 : vector<1x128xf32>
    %152 = vector.extract_strided_slice %149 {offsets = [0, 0], sizes = [1, 128], strides = [1, 1]} : vector<1x384xf32> to vector<1x128xf32>
    %153 = vector.extract_strided_slice %149 {offsets = [0, 128], sizes = [1, 128], strides = [1, 1]} : vector<1x384xf32> to vector<1x128xf32>
    %154 = vector.extract_strided_slice %149 {offsets = [0, 256], sizes = [1, 128], strides = [1, 1]} : vector<1x384xf32> to vector<1x128xf32>
    %155 = arith.mulf %153, %136 : vector<1x128xf32>
    %156 = arith.mulf %152, %151 : vector<1x128xf32>
    %157 = arith.addf %155, %156 : vector<1x128xf32>
    %158 = math.tanh %157 : vector<1x128xf32>
    %159 = arith.mulf %154, %158 : vector<1x128xf32>
    %c6_52 = arith.constant 6 : index
    %c0_53 = arith.constant 0 : index
    %160 = vector.load %arg9[%c6_52, %c0_53] : memref<8x512xf32, #tpu.memory_space<vmem>>, vector<1x512xf32>
    %161 = arith.truncf %159 : vector<1x128xf32> to vector<1x128xbf16>
    %c0_54 = arith.constant 0 : index
    %c0_55 = arith.constant 0 : index
    %162 = vector.load %arg4[%c0_54, %c0_55] : memref<128x512xbf16, #tpu.memory_space<vmem>>, vector<128x512xbf16>
    %cst_56 = arith.constant dense<0.000000e+00> : vector<1x512xf32>
    %163 = tpu.matmul %161, %162, %cst_56 {dimension_numbers = #tpu.dot_dimension_numbers<[1], [0], [0], [1], [0, 0, 1, 1], [], []>} : vector<1x128xbf16>, vector<128x512xbf16>, vector<1x512xf32> -> vector<1x512xf32>
    %164 = arith.addf %160, %163 : vector<1x512xf32>
    %165 = vector.extract_strided_slice %164 {offsets = [0, 0], sizes = [1, 384], strides = [1, 1]} : vector<1x512xf32> to vector<1x384xf32>
    %166 = arith.negf %165 : vector<1x384xf32>
    %167 = math.exp %166 : vector<1x384xf32>
    %cst_57 = arith.constant 1.000000e+00 : f32
    %168 = vector.broadcast %cst_57 : f32 to vector<1x384xf32>
    %169 = arith.addf %168, %167 : vector<1x384xf32>
    %170 = arith.divf %168, %169 : vector<1x384xf32>
    %171 = vector.extract_strided_slice %164 {offsets = [0, 384], sizes = [1, 128], strides = [1, 1]} : vector<1x512xf32> to vector<1x128xf32>
    %172 = math.tanh %171 : vector<1x128xf32>
    %173 = vector.extract_strided_slice %170 {offsets = [0, 0], sizes = [1, 128], strides = [1, 1]} : vector<1x384xf32> to vector<1x128xf32>
    %174 = vector.extract_strided_slice %170 {offsets = [0, 128], sizes = [1, 128], strides = [1, 1]} : vector<1x384xf32> to vector<1x128xf32>
    %175 = vector.extract_strided_slice %170 {offsets = [0, 256], sizes = [1, 128], strides = [1, 1]} : vector<1x384xf32> to vector<1x128xf32>
    %176 = arith.mulf %174, %157 : vector<1x128xf32>
    %177 = arith.mulf %173, %172 : vector<1x128xf32>
    %178 = arith.addf %176, %177 : vector<1x128xf32>
    %179 = math.tanh %178 : vector<1x128xf32>
    %180 = arith.mulf %175, %179 : vector<1x128xf32>
    %c7_58 = arith.constant 7 : index
    %c0_59 = arith.constant 0 : index
    %181 = vector.load %arg9[%c7_58, %c0_59] : memref<8x512xf32, #tpu.memory_space<vmem>>, vector<1x512xf32>
    %182 = arith.truncf %180 : vector<1x128xf32> to vector<1x128xbf16>
    %c0_60 = arith.constant 0 : index
    %c0_61 = arith.constant 0 : index
    %183 = vector.load %arg4[%c0_60, %c0_61] : memref<128x512xbf16, #tpu.memory_space<vmem>>, vector<128x512xbf16>
    %cst_62 = arith.constant dense<0.000000e+00> : vector<1x512xf32>
    %184 = tpu.matmul %182, %183, %cst_62 {dimension_numbers = #tpu.dot_dimension_numbers<[1], [0], [0], [1], [0, 0, 1, 1], [], []>} : vector<1x128xbf16>, vector<128x512xbf16>, vector<1x512xf32> -> vector<1x512xf32>
    %185 = arith.addf %181, %184 : vector<1x512xf32>
    %186 = vector.extract_strided_slice %185 {offsets = [0, 0], sizes = [1, 384], strides = [1, 1]} : vector<1x512xf32> to vector<1x384xf32>
    %187 = arith.negf %186 : vector<1x384xf32>
    %188 = math.exp %187 : vector<1x384xf32>
    %cst_63 = arith.constant 1.000000e+00 : f32
    %189 = vector.broadcast %cst_63 : f32 to vector<1x384xf32>
    %190 = arith.addf %189, %188 : vector<1x384xf32>
    %191 = arith.divf %189, %190 : vector<1x384xf32>
    %192 = vector.extract_strided_slice %185 {offsets = [0, 384], sizes = [1, 128], strides = [1, 1]} : vector<1x512xf32> to vector<1x128xf32>
    %193 = math.tanh %192 : vector<1x128xf32>
    %194 = vector.extract_strided_slice %191 {offsets = [0, 0], sizes = [1, 128], strides = [1, 1]} : vector<1x384xf32> to vector<1x128xf32>
    %195 = vector.extract_strided_slice %191 {offsets = [0, 128], sizes = [1, 128], strides = [1, 1]} : vector<1x384xf32> to vector<1x128xf32>
    %196 = vector.extract_strided_slice %191 {offsets = [0, 256], sizes = [1, 128], strides = [1, 1]} : vector<1x384xf32> to vector<1x128xf32>
    %197 = arith.mulf %195, %178 : vector<1x128xf32>
    %198 = arith.mulf %194, %193 : vector<1x128xf32>
    %199 = arith.addf %197, %198 : vector<1x128xf32>
    %200 = math.tanh %199 : vector<1x128xf32>
    %201 = arith.mulf %196, %200 : vector<1x128xf32>
    %202 = tpu.concatenate %54, %75, %96, %117, %138, %159, %180, %201 in 0 : vector<1x128xf32>, vector<1x128xf32>, vector<1x128xf32>, vector<1x128xf32>, vector<1x128xf32>, vector<1x128xf32>, vector<1x128xf32>, vector<1x128xf32> -> vector<8x128xf32>
    %203 = arith.truncf %202 : vector<8x128xf32> to vector<8x128xbf16>
    %c0_64 = arith.constant 0 : index
    %c0_65 = arith.constant 0 : index
    %204 = vector.load %arg6[%c0_64, %c0_65] : memref<128x128xbf16, #tpu.memory_space<vmem>>, vector<128x128xbf16>
    %cst_66 = arith.constant dense<0.000000e+00> : vector<8x128xf32>
    %205 = tpu.matmul %203, %204, %cst_66 {dimension_numbers = #tpu.dot_dimension_numbers<[1], [0], [0], [1], [0, 0, 1, 1], [], []>} : vector<8x128xbf16>, vector<128x128xbf16>, vector<8x128xf32> -> vector<8x128xf32>
    %c0_67 = arith.constant 0 : index
    %c0_68 = arith.constant 0 : index
    %206 = vector.load %arg7[%c0_67, %c0_68] : memref<1x128xf32, #tpu.memory_space<vmem>>, vector<1x128xf32>
    %207 = vector.broadcast %206 : vector<1x128xf32> to vector<8x128xf32>
    %208 = arith.addf %205, %207 : vector<8x128xf32>
    %cst_69 = arith.constant dense<0xFF800000> : vector<8xf32>
    %209 = vector.multi_reduction <maximumf>, %208, %cst_69 [1] : vector<8x128xf32> to vector<8xf32>
    %210 = vector.shape_cast %209 : vector<8xf32> to vector<8x1xf32>
    %211 = vector.broadcast %210 : vector<8x1xf32> to vector<8x128xf32>
    %212 = arith.subf %208, %211 : vector<8x128xf32>
    %213 = math.exp %212 : vector<8x128xf32>
    %cst_70 = arith.constant dense<0.000000e+00> : vector<8xf32>
    %214 = vector.multi_reduction <add>, %213, %cst_70 [1] : vector<8x128xf32> to vector<8xf32>
    %215 = vector.shape_cast %214 : vector<8xf32> to vector<8x1xf32>
    %216 = math.log %215 : vector<8x1xf32>
    %217 = vector.broadcast %216 : vector<8x1xf32> to vector<8x128xf32>
    %218 = arith.subf %212, %217 : vector<8x128xf32>
    %c0_71 = arith.constant 0 : index
    %c0_72 = arith.constant 0 : index
    %219 = vector.load %arg8[%c0_71, %c0_72] : memref<8x128xf32, #tpu.memory_space<vmem>>, vector<8x128xf32>
    tpu.vector_store %arg8[%c0_71, %c0_72], %218 {strides = array<i32>} : memref<8x128xf32, #tpu.memory_space<vmem>>, vector<8x128xf32>,
    return
  }
  func.func @transform_0(%arg0: i32, %arg1: memref<8xi32, #tpu.memory_space<smem>>) -> (i32, i32) {
    %c0_i32 = arith.constant 0 : i32
    %c0_i32_0 = arith.constant 0 : i32
    %c0_i32_1 = arith.constant 0 : i32
    return %c0_i32, %c0_i32_0 : i32, i32
  }
  func.func @transform_1(%arg0: i32, %arg1: memref<8xi32, #tpu.memory_space<smem>>) -> (i32, i32) {
    %c0_i32 = arith.constant 0 : i32
    %c0_i32_0 = arith.constant 0 : i32
    %c0_i32_1 = arith.constant 0 : i32
    return %c0_i32, %c0_i32_0 : i32, i32
  }
  func.func @transform_2(%arg0: i32, %arg1: memref<8xi32, #tpu.memory_space<smem>>) -> (i32, i32) {
    %c0_i32 = arith.constant 0 : i32
    %c0_i32_0 = arith.constant 0 : i32
    %c0_i32_1 = arith.constant 0 : i32
    return %c0_i32, %c0_i32_0 : i32, i32
  }
  func.func @transform_3(%arg0: i32, %arg1: memref<8xi32, #tpu.memory_space<smem>>) -> (i32, i32) {
    %c0_i32 = arith.constant 0 : i32
    %c0_i32_0 = arith.constant 0 : i32
    %c0_i32_1 = arith.constant 0 : i32
    return %c0_i32, %c0_i32_0 : i32, i32
  }
  func.func @transform_4(%arg0: i32, %arg1: memref<8xi32, #tpu.memory_space<smem>>) -> (i32, i32) {
    %c0_i32 = arith.constant 0 : i32
    %c0_i32_0 = arith.constant 0 : i32
    %c0_i32_1 = arith.constant 0 : i32
    return %c0_i32, %c0_i32_0 : i32, i32
  }
  func.func @transform_5(%arg0: i32, %arg1: memref<8xi32, #tpu.memory_space<smem>>) -> (i32, i32) {
    %c0_i32 = arith.constant 0 : i32
    %c0_i32_0 = arith.constant 0 : i32
    %c0_i32_1 = arith.constant 0 : i32
    return %c0_i32, %c0_i32_0 : i32, i32
  }
  func.func @transform_6(%arg0: i32, %arg1: memref<8xi32, #tpu.memory_space<smem>>) -> (i32, i32) {
    %c0_i32 = arith.constant 0 : i32
    %c0_i32_0 = arith.constant 0 : i32
    %c0_i32_1 = arith.constant 0 : i32
    return %c0_i32, %c0_i32_0 : i32, i32
  }
}

</mosaic_0001>

<llo_original>
// kernel: lstm_tagger_forward.1
$region0: #{lstm_tagger_forward.1}
  #allocation0 [shape = 'u32[]', space=smem, size = 0x4, offset = 0x4, fixed_abs, tag = 'smem constant byte address 0x4 - core index']
  #allocation1 [shape = 'u32[144,128]{1,0:T(1,128)}', space=vmem, size = 0x12000, scoped, tag = 'internal scratch']
  #allocation2 [shape = 'f32[8,512]{1,0:T(8,128)}', space=vmem, size = 0x4000, scoped, tag = 'scratch operand']
  #allocation3 [shape = 's32[1]{0}', space=sflag, size = 0x4, scoped, tag = 'scoped memory for lstm_tagger_forward.1']
  #allocation4 [shape = 'u8[512]{0}', space=smem, size = 0x200, scoped, tag = 'prefetched SMEM operand 0']
  %s0 = inlined_call_operand.hbm [shape: s32[8], index: 0, kind: input, shape index: {}]
  %s1 = inlined_call_operand.hbm [shape: f32[40,128], index: 1, kind: input, shape index: {}]
  %s2 = inlined_call_operand.hbm [shape: bf16[128,512], index: 2, kind: input, shape index: {}]
  %s3 = inlined_call_operand.hbm [shape: bf16[128,512], index: 3, kind: input, shape index: {}]
  %s4 = inlined_call_operand.vmem [shape: f32[1,512], index: 4, kind: input, shape index: {}]
  %s5 = inlined_call_operand.hbm [shape: bf16[128,128], index: 5, kind: input, shape index: {}]
  %s6 = inlined_call_operand.vmem [shape: f32[1,128], index: 6, kind: input, shape index: {}]
  %s7 = inlined_call_operand.hbm [shape: f32[8,128], index: 7, kind: output, shape index: {}]
  %s8 = sld [smem:[#allocation0]]
  $region50: #{lstm_tagger_forward.1} parent=0
    _
  %s10 = ssub.s32 1, %s8
  %s11 = scalar_select 0, %s10, %s8
  %13 = dma.hbm_to_smem %s0, 16, [#allocation4], [#allocation3]
  %14 = dma.done [#allocation3], 16
  %15 = sfence
  $region1: #{lstm_tagger_forward.1} parent=0
    #allocation5 [shape = 'u8[20480]{0}', space=vmem, size = 0x5000, scoped, tag = 'input window, operand 1, single buffered']
    #allocation6 [shape = 's32[1]{0}', space=sflag, size = 0x4, scoped, tag = 'scoped memory for lstm_tagger_forward.1']
    #allocation7 [shape = 's32[1]{0}', space=sflag, size = 0x4, scoped, tag = 'scoped memory for lstm_tagger_forward.1']
    #allocation8 [shape = 'u8[131072]{0}', space=vmem, size = 0x20000, scoped, tag = 'input window, operand 2, single buffered']
    #allocation9 [shape = 's32[1]{0}', space=sflag, size = 0x4, scoped, tag = 'scoped memory for lstm_tagger_forward.1']
    #allocation10 [shape = 'u8[131072]{0}', space=vmem, size = 0x20000, scoped, tag = 'input window, operand 3, single buffered']
    #allocation11 [shape = 'u8[32768]{0}', space=vmem, size = 0x8000, scoped, tag = 'input window, operand 5, single buffered']
    #allocation12 [shape = 's32[1]{0}', space=sflag, size = 0x4, scoped, tag = 'scoped memory for lstm_tagger_forward.1']
    #allocation13 [shape = 'u8[4096]{0}', space=vmem, size = 0x1000, scoped, tag = 'output window, operand 0, single buffered']
    %16 = vsyncpa [#allocation6], 0
    %17 = vsyncpa [#allocation9], 0
    %18 = vsyncpa [#allocation12], 0
    %19 = vsyncpa [#allocation7], 0
    // Predicated region
    $region2: #{lstm_tagger_forward.1} parent=1 // pred_check
      _
    $region3: #{lstm_tagger_forward.1} parent=1 // pred_check_branch
      %21 = sbr.rel (0) target = $region5
    $region4: #{lstm_tagger_forward.1} parent=1 // pred_region
      %s23 = ssub.s32 640, 640
      %24 = vsyncadd [#allocation6], %s23
      %s25 = sshll.u32 [#allocation5], 4
      %s26 = int_to_ptr.vmem [resolvable:$true] %s25
      %31 = dma.hbm_to_vmem [thread:$0]  %s1, 640, %s26, [#allocation6], 128, 128, 8
    $region5: #{lstm_tagger_forward.1} parent=1 // pred_fallthru
      _
    // Predicated region
    $region6: #{lstm_tagger_forward.1} parent=1 // pred_check
      _
    $region7: #{lstm_tagger_forward.1} parent=1 // pred_check_branch
      %33 = sbr.rel (0) target = $region9
    $region8: #{lstm_tagger_forward.1} parent=1 // pred_region
      %s35 = ssub.s32 4096, 4096
      %36 = vsyncadd [#allocation9], %s35
      %s37 = sshll.u32 [#allocation8], 4
      %s38 = int_to_ptr.vmem [resolvable:$true] %s37
      %43 = dma.hbm_to_vmem [thread:$0]  %s2, 4096, %s38, [#allocation9], 256, 256, 16
    $region9: #{lstm_tagger_forward.1} parent=1 // pred_fallthru
      _
    // Predicated region
    $region10: #{lstm_tagger_forward.1} parent=1 // pred_check
      _
    $region11: #{lstm_tagger_forward.1} parent=1 // pred_check_branch
      %45 = sbr.rel (0) target = $region13
    $region12: #{lstm_tagger_forward.1} parent=1 // pred_region
      %s47 = ssub.s32 4096, 4096
      %48 = vsyncadd [#allocation9], %s47
      %s49 = sshll.u32 [#allocation10], 4
      %s50 = int_to_ptr.vmem [resolvable:$true] %s49
      %55 = dma.hbm_to_vmem [thread:$0]  %s3, 4096, %s50, [#allocation9], 256, 256, 16
    $region13: #{lstm_tagger_forward.1} parent=1 // pred_fallthru
      _
    // Predicated region
    $region14: #{lstm_tagger_forward.1} parent=1 // pred_check
      _
    $region15: #{lstm_tagger_forward.1} parent=1 // pred_check_branch
      %57 = sbr.rel (0) target = $region17
    $region16: #{lstm_tagger_forward.1} parent=1 // pred_region
      _
    $region17: #{lstm_tagger_forward.1} parent=1 // pred_fallthru
      _
    // Predicated region
    $region18: #{lstm_tagger_forward.1} parent=1 // pred_check
      _
    $region19: #{lstm_tagger_forward.1} parent=1 // pred_check_branch
      %59 = sbr.rel (0) target = $region21
    $region20: #{lstm_tagger_forward.1} parent=1 // pred_region
      %s61 = ssub.s32 1024, 1024
      %62 = vsyncadd [#allocation12], %s61
      %s63 = sshll.u32 [#allocation11], 4
      %s64 = int_to_ptr.vmem [resolvable:$true] %s63
      %69 = dma.hbm_to_vmem [thread:$0]  %s5, 1024, %s64, [#allocation12], 64, 64, 4
    $region21: #{lstm_tagger_forward.1} parent=1 // pred_fallthru
      _
    // Predicated region
    $region22: #{lstm_tagger_forward.1} parent=1 // pred_check
      _
    $region23: #{lstm_tagger_forward.1} parent=1 // pred_check_branch
      %71 = sbr.rel (0) target = $region25
    $region24: #{lstm_tagger_forward.1} parent=1 // pred_region
      _
    $region25: #{lstm_tagger_forward.1} parent=1 // pred_fallthru
      _
    // Predicated region
    $region26: #{lstm_tagger_forward.1} parent=1 // pred_check
      _
    $region27: #{lstm_tagger_forward.1} parent=1 // pred_check_branch
      %73 = sbr.rel (0) target = $region29
    $region28: #{lstm_tagger_forward.1} parent=1 // pred_region
      %74 = dma.done [#allocation6], 640
    $region29: #{lstm_tagger_forward.1} parent=1 // pred_fallthru
      _
    // Predicated region
    $region30: #{lstm_tagger_forward.1} parent=1 // pred_check
      _
    $region31: #{lstm_tagger_forward.1} parent=1 // pred_check_branch
      %76 = sbr.rel (0) target = $region33
    $region32: #{lstm_tagger_forward.1} parent=1 // pred_region
      %77 = dma.done [#allocation9], 4096
    $region33: #{lstm_tagger_forward.1} parent=1 // pred_fallthru
      _
    // Predicated region
    $region34: #{lstm_tagger_forward.1} parent=1 // pred_check
      _
    $region35: #{lstm_tagger_forward.1} parent=1 // pred_check_branch
      %79 = sbr.rel (0) target = $region37
    $region36: #{lstm_tagger_forward.1} parent=1 // pred_region
      %80 = dma.done [#allocation9], 4096
    $region37: #{lstm_tagger_forward.1} parent=1 // pred_fallthru
      _
    // Predicated region
    $region38: #{lstm_tagger_forward.1} parent=1 // pred_check
      _
    $region39: #{lstm_tagger_forward.1} parent=1 // pred_check_branch
      %82 = sbr.rel (0) target = $region41
    $region40: #{lstm_tagger_forward.1} parent=1 // pred_region
      %83 = dma.done [#allocation12], 1024
    $region41: #{lstm_tagger_forward.1} parent=1 // pred_fallthru
      _
    %s85 = sld [smem:[#allocation4]]
    %s86 = scalar_lea.vmem [#allocation5], %s85
    %v87 = vld [vmem:[%s86] sm:$0x1]
    %s88 = sld [smem:[#allocation4 + $0x1]]
    %s89 = scalar_lea.vmem [#allocation5], %s88
    %v90 = vld [vmem:[%s89] sm:$0x1]
    %s91 = sld [smem:[#allocation4 + $0x2]]
    %s92 = scalar_lea.vmem [#allocation5], %s91
    %v93 = vld [vmem:[%s92] sm:$0x1]
    %s94 = sld [smem:[#allocation4 + $0x3]]
    %s95 = scalar_lea.vmem [#allocation5], %s94
    %v96 = vld [vmem:[%s95] sm:$0x1]
    %s97 = sld [smem:[#allocation4 + $0x4]]
    %s98 = scalar_lea.vmem [#allocation5], %s97
    %v99 = vld [vmem:[%s98] sm:$0x1]
    %s100 = sld [smem:[#allocation4 + $0x5]]
    %s101 = scalar_lea.vmem [#allocation5], %s100
    %v102 = vld [vmem:[%s101] sm:$0x1]
    %s103 = sld [smem:[#allocation4 + $0x6]]
    %s104 = scalar_lea.vmem [#allocation5], %s103
    %v105 = vld [vmem:[%s104] sm:$0x1]
    %s106 = sld [smem:[#allocation4 + $0x7]]
    %s107 = scalar_lea.vmem [#allocation5], %s106
    %v108 = vld [vmem:[%s107] sm:$0x1]
    %v110 = vrot.slane %v90, 7
    %v113 = vrot.slane %v93, 6
    %v116 = vrot.slane %v96, 5
    %v119 = vrot.slane %v99, 4
    %v122 = vrot.slane %v102, 3
    %v125 = vrot.slane %v105, 2
    %v128 = vrot.slane %v108, 1
    %vm130 = vcmask 1040384
    %v131 = vsel %vm130, %v87, %v110
    %vm132 = vcmask 1041408
    %v133 = vsel %vm132, %v131, %v113
    %vm134 = vcmask 1042432
    %v135 = vsel %vm134, %v133, %v116
    %vm136 = vcmask 1043456
    %v137 = vsel %vm136, %v135, %v119
    %vm138 = vcmask 1044480
    %v139 = vsel %vm138, %v137, %v122
    %vm140 = vcmask 1045504
    %v141 = vsel %vm140, %v139, %v125
    %vm142 = vcmask 1046528
    %v143 = vsel %vm142, %v141, %v128
    %v144 = vpack.c.bf16 %v143, %v143
    %v145 = vld [vmem:[#allocation8] sm:$0xff]
    %v146 = vld [vmem:[#allocation8 + $0x8] sm:$0xff]
    %v147 = vld [vmem:[#allocation8 + $0x10] sm:$0xff]
    %v148 = vld [vmem:[#allocation8 + $0x18] sm:$0xff]
    %v149 = vld [vmem:[#allocation8 + $0x20] sm:$0xff]
    %v150 = vld [vmem:[#allocation8 + $0x28] sm:$0xff]
    %v151 = vld [vmem:[#allocation8 + $0x30] sm:$0xff]
    %v152 = vld [vmem:[#allocation8 + $0x38] sm:$0xff]
    %v153 = vld [vmem:[#allocation8 + $0x40] sm:$0xff]
    %v154 = vld [vmem:[#allocation8 + $0x48] sm:$0xff]
    %v155 = vld [vmem:[#allocation8 + $0x50] sm:$0xff]
    %v156 = vld [vmem:[#allocation8 + $0x58] sm:$0xff]
    %v157 = vld [vmem:[#allocation8 + $0x60] sm:$0xff]
    %v158 = vld [vmem:[#allocation8 + $0x68] sm:$0xff]
    %v159 = vld [vmem:[#allocation8 + $0x70] sm:$0xff]
    %v160 = vld [vmem:[#allocation8 + $0x78] sm:$0xff]
    %v161 = vld [vmem:[#allocation8 + $0x80] sm:$0xff]
    %v162 = vld [vmem:[#allocation8 + $0x88] sm:$0xff]
    %v163 = vld [vmem:[#allocation8 + $0x90] sm:$0xff]
    %v164 = vld [vmem:[#allocation8 + $0x98] sm:$0xff]
    %v165 = vld [vmem:[#allocation8 + $0xa0] sm:$0xff]
    %v166 = vld [vmem:[#allocation8 + $0xa8] sm:$0xff]
    %v167 = vld [vmem:[#allocation8 + $0xb0] sm:$0xff]
    %v168 = vld [vmem:[#allocation8 + $0xb8] sm:$0xff]
    %v169 = vld [vmem:[#allocation8 + $0xc0] sm:$0xff]
    %v170 = vld [vmem:[#allocation8 + $0xc8] sm:$0xff]
    %v171 = vld [vmem:[#allocation8 + $0xd0] sm:$0xff]
    %v172 = vld [vmem:[#allocation8 + $0xd8] sm:$0xff]
    %v173 = vld [vmem:[#allocation8 + $0xe0] sm:$0xff]
    %v174 = vld [vmem:[#allocation8 + $0xe8] sm:$0xff]
    %v175 = vld [vmem:[#allocation8 + $0xf0] sm:$0xff]
    %v176 = vld [vmem:[#allocation8 + $0xf8] sm:$0xff]
    %v177 = vld [vmem:[%s4] sm:$0xf]
    %v179 = vlaneseq
    %v180 = vshrl.u32 %v179, 7
    %v181 = vsub.s32 0, %v180
    %v182 = vrot.slane %v177, %v181
    %v183 = vlaneseq
    %v184 = vshrl.u32 %v183, 7
    %v185 = vsub.s32 1, %v184
    %v186 = vrot.slane %v177, %v185
    %v187 = vlaneseq
    %v188 = vshrl.u32 %v187, 7
    %v189 = vsub.s32 2, %v188
    %v190 = vrot.slane %v177, %v189
    %v191 = vlaneseq
    %v192 = vshrl.u32 %v191, 7
    %v193 = vsub.s32 3, %v192
    %v194 = vrot.slane %v177, %v193
    %v231 = vunpack.c.l.b16 %v145
    %v232 = vunpack.c.h.b16 %v145
    %v233 = vunpack.c.l.b16 %v146
    %v234 = vunpack.c.h.b16 %v146
    %v235 = vunpack.c.l.b16 %v147
    %v236 = vunpack.c.h.b16 %v147
    %v237 = vunpack.c.l.b16 %v148
    %v238 = vunpack.c.h.b16 %v148
    %v239 = vunpack.c.l.b16 %v149
    %v240 = vunpack.c.h.b16 %v149
    %v241 = vunpack.c.l.b16 %v150
    %v242 = vunpack.c.h.b16 %v150
    %v243 = vunpack.c.l.b16 %v151
    %v244 = vunpack.c.h.b16 %v151
    %v245 = vunpack.c.l.b16 %v152
    %v246 = vunpack.c.h.b16 %v152
    %v247 = vunpack.c.l.b16 %v153
    %v248 = vunpack.c.h.b16 %v153
    %v249 = vunpack.c.l.b16 %v154
    %v250 = vunpack.c.h.b16 %v154
    %v251 = vunpack.c.l.b16 %v155
    %v252 = vunpack.c.h.b16 %v155
    %v253 = vunpack.c.l.b16 %v156
    %v254 = vunpack.c.h.b16 %v156
    %v255 = vunpack.c.l.b16 %v157
    %v256 = vunpack.c.h.b16 %v157
    %v257 = vunpack.c.l.b16 %v158
    %v258 = vunpack.c.h.b16 %v158
    %v259 = vunpack.c.l.b16 %v159
    %v260 = vunpack.c.h.b16 %v159
    %v261 = vunpack.c.l.b16 %v160
    %v262 = vunpack.c.h.b16 %v160
    %v263 = vunpack.c.l.b16 %v161
    %v264 = vunpack.c.h.b16 %v161
    %v265 = vunpack.c.l.b16 %v162
    %v266 = vunpack.c.h.b16 %v162
    %v267 = vunpack.c.l.b16 %v163
    %v268 = vunpack.c.h.b16 %v163
    %v269 = vunpack.c.l.b16 %v164
    %v270 = vunpack.c.h.b16 %v164
    %v271 = vunpack.c.l.b16 %v165
    %v272 = vunpack.c.h.b16 %v165
    %v273 = vunpack.c.l.b16 %v166
    %v274 = vunpack.c.h.b16 %v166
    %v275 = vunpack.c.l.b16 %v167
    %v276 = vunpack.c.h.b16 %v167
    %v277 = vunpack.c.l.b16 %v168
    %v278 = vunpack.c.h.b16 %v168
    %v279 = vunpack.c.l.b16 %v169
    %v280 = vunpack.c.h.b16 %v169
    %v281 = vunpack.c.l.b16 %v170
    %v282 = vunpack.c.h.b16 %v170
    %v283 = vunpack.c.l.b16 %v171
    %v284 = vunpack.c.h.b16 %v171
    %v285 = vunpack.c.l.b16 %v172
    %v286 = vunpack.c.h.b16 %v172
    %v287 = vunpack.c.l.b16 %v173
    %v288 = vunpack.c.h.b16 %v173
    %v289 = vunpack.c.l.b16 %v174
    %v290 = vunpack.c.h.b16 %v174
    %v291 = vunpack.c.l.b16 %v175
    %v292 = vunpack.c.h.b16 %v175
    %v293 = vunpack.c.l.b16 %v176
    %v294 = vunpack.c.h.b16 %v176
    %v295 = vpack.c.b16 %v235, %v231
    %v296 = vpack.c.b16 %v236, %v232
    %v297 = vpack.c.b16 %v237, %v233
    %v298 = vpack.c.b16 %v238, %v234
    %v299 = vpack.c.b16 %v243, %v239
    %v300 = vpack.c.b16 %v244, %v240
    %v301 = vpack.c.b16 %v245, %v241
    %v302 = vpack.c.b16 %v246, %v242
    %v303 = vpack.c.b16 %v251, %v247
    %v304 = vpack.c.b16 %v252, %v248
    %v305 = vpack.c.b16 %v253, %v249
    %v306 = vpack.c.b16 %v254, %v250
    %v307 = vpack.c.b16 %v259, %v255
    %v308 = vpack.c.b16 %v260, %v256
    %v309 = vpack.c.b16 %v261, %v257
    %v310 = vpack.c.b16 %v262, %v258
    %v311 = vpack.c.b16 %v267, %v263
    %v312 = vpack.c.b16 %v268, %v264
    %v313 = vpack.c.b16 %v269, %v265
    %v314 = vpack.c.b16 %v270, %v266
    %v315 = vpack.c.b16 %v275, %v271
    %v316 = vpack.c.b16 %v276, %v272
    %v317 = vpack.c.b16 %v277, %v273
    %v318 = vpack.c.b16 %v278, %v274
    %v319 = vpack.c.b16 %v283, %v279
    %v320 = vpack.c.b16 %v284, %v280
    %v321 = vpack.c.b16 %v285, %v281
    %v322 = vpack.c.b16 %v286, %v282
    %v323 = vpack.c.b16 %v291, %v287
    %v324 = vpack.c.b16 %v292, %v288
    %v325 = vpack.c.b16 %v293, %v289
    %v326 = vpack.c.b16 %v294, %v290
    %359 = vmatprep.subr.bf16.mxu0 %v296
    %360 = vmatpush1.bf16.msra.mxu0 %v295
    %361 = vmatprep.subr.bf16.mxu0 %v300
    %362 = vmatpush1.bf16.msra.mxu0 %v299
    %363 = vmatprep.subr.bf16.mxu0 %v304
    %364 = vmatpush1.bf16.msra.mxu0 %v303
    %365 = vmatprep.subr.bf16.mxu0 %v308
    %366 = vmatpush1.bf16.msra.mxu0 %v307
    %367 = vmatprep.subr.bf16.mxu0 %v312
    %368 = vmatpush1.bf16.msra.mxu0 %v311
    %369 = vmatprep.subr.bf16.mxu0 %v316
    %370 = vmatpush1.bf16.msra.mxu0 %v315
    %371 = vmatprep.subr.bf16.mxu0 %v320
    %372 = vmatpush1.bf16.msra.mxu0 %v319
    %373 = vmatprep.subr.bf16.mxu0 %v324
    %374 = vmatpush1.bf16.msra.mxu0 %v323
    %375 = vmatprep.subr.bf16.mxu0 0
    %376 = vmatpush1.bf16.msra.mxu0 0
    %377 = vmatprep.subr.bf16.mxu0 0
    %378 = vmatpush1.bf16.msra.mxu0 0
    %379 = vmatprep.subr.bf16.mxu0 0
    %380 = vmatpush1.bf16.msra.mxu0 0
    %381 = vmatprep.subr.bf16.mxu0 0
    %382 = vmatpush1.bf16.msra.mxu0 0
    %383 = vmatprep.subr.bf16.mxu0 0
    %384 = vmatpush1.bf16.msra.mxu0 0
    %385 = vmatprep.subr.bf16.mxu0 0
    %386 = vmatpush1.bf16.msra.mxu0 0
    %387 = vmatprep.subr.bf16.mxu0 0
    %388 = vmatpush1.bf16.msra.mxu0 0
    %389 = vmatprep.subr.bf16.mxu0 0
    %390 = vmatpush1.bf16.msra.mxu0 0
    %391 = vmatprep.mubr.bf16.mxu0 0
    %392 = vmatmul.mubr.bf16.gmra.mrb[0].mxu0 %v144
    %v393 = vpop.f32.mrb[0].mxu0
    %v394 = vadd.f32 %v182, %v393
    %v395 = vpop.f32.mrb[0].mxu0
    %v396 = vadd.f32 %v186, %v395
    %v397 = vpop.f32.mrb[0].mxu0
    %v398 = vpop.f32.mrb[0].mxu0
    %399 = vdwg.mxu0
    %400 = vmatprep.subr.bf16.mxu0 %v298
    %401 = vmatpush1.bf16.msra.mxu0 %v297
    %402 = vmatprep.subr.bf16.mxu0 %v302
    %403 = vmatpush1.bf16.msra.mxu0 %v301
    %404 = vmatprep.subr.bf16.mxu0 %v306
    %405 = vmatpush1.bf16.msra.mxu0 %v305
    %406 = vmatprep.subr.bf16.mxu0 %v310
    %407 = vmatpush1.bf16.msra.mxu0 %v309
    %408 = vmatprep.subr.bf16.mxu0 %v314
    %409 = vmatpush1.bf16.msra.mxu0 %v313
    %410 = vmatprep.subr.bf16.mxu0 %v318
    %411 = vmatpush1.bf16.msra.mxu0 %v317
    %412 = vmatprep.subr.bf16.mxu0 %v322
    %413 = vmatpush1.bf16.msra.mxu0 %v321
    %414 = vmatprep.subr.bf16.mxu0 %v326
    %415 = vmatpush1.bf16.msra.mxu0 %v325
    %416 = vmatprep.subr.bf16.mxu0 0
    %417 = vmatpush1.bf16.msra.mxu0 0
    %418 = vmatprep.subr.bf16.mxu0 0
    %419 = vmatpush1.bf16.msra.mxu0 0
    %420 = vmatprep.subr.bf16.mxu0 0
    %421 = vmatpush1.bf16.msra.mxu0 0
    %422 = vmatprep.subr.bf16.mxu0 0
    %423 = vmatpush1.bf16.msra.mxu0 0
    %424 = vmatprep.subr.bf16.mxu0 0
    %425 = vmatpush1.bf16.msra.mxu0 0
    %426 = vmatprep.subr.bf16.mxu0 0
    %427 = vmatpush1.bf16.msra.mxu0 0
    %428 = vmatprep.subr.bf16.mxu0 0
    %429 = vmatpush1.bf16.msra.mxu0 0
    %430 = vmatprep.subr.bf16.mxu0 0
    %431 = vmatpush1.bf16.msra.mxu0 0
    %432 = vmatprep.mubr.bf16.mxu0 0
    %433 = vmatmul.mubr.bf16.gmra.mrb[0].mxu0 %v144
    %v434 = vpop.f32.mrb[0].mxu0
    %v435 = vadd.f32 %v190, %v434
    %v436 = vpop.f32.mrb[0].mxu0
    %v437 = vadd.f32 %v194, %v436
    %v438 = vpop.f32.mrb[0].mxu0
    %v439 = vpop.f32.mrb[0].mxu0
    %440 = vdwg.mxu0
    %441 = vst [vmem:[#allocation2] sm:$0xff] %v394
    %442 = vst [vmem:[#allocation2 + $0x8] sm:$0xff] %v396
    %443 = vst [vmem:[#allocation2 + $0x10] sm:$0xff] %v435
    %444 = vst [vmem:[#allocation2 + $0x18] sm:$0xff] %v437
    %v445 = vld [vmem:[#allocation2] ss:$8 sm:$0xf]
    %v446 = vld [vmem:[#allocation10] sm:$0xff]
    %v447 = vld [vmem:[#allocation10 + $0x8] sm:$0xff]
    %v448 = vld [vmem:[#allocation10 + $0x10] sm:$0xff]
    %v449 = vld [vmem:[#allocation10 + $0x18] sm:$0xff]
    %v450 = vld [vmem:[#allocation10 + $0x20] sm:$0xff]
    %v451 = vld [vmem:[#allocation10 + $0x28] sm:$0xff]
    %v452 = vld [vmem:[#allocation10 + $0x30] sm:$0xff]
    %v453 = vld [vmem:[#allocation10 + $0x38] sm:$0xff]
    %v454 = vld [vmem:[#allocation10 + $0x40] sm:$0xff]
    %v455 = vld [vmem:[#allocation10 + $0x48] sm:$0xff]
    %v456 = vld [vmem:[#allocation10 + $0x50] sm:$0xff]
    %v457 = vld [vmem:[#allocation10 + $0x58] sm:$0xff]
    %v458 = vld [vmem:[#allocation10 + $0x60] sm:$0xff]
    %v459 = vld [vmem:[#allocation10 + $0x68] sm:$0xff]
    %v460 = vld [vmem:[#allocation10 + $0x70] sm:$0xff]
    %v461 = vld [vmem:[#allocation10 + $0x78] sm:$0xff]
    %v462 = vld [vmem:[#allocation10 + $0x80] sm:$0xff]
    %v463 = vld [vmem:[#allocation10 + $0x88] sm:$0xff]
    %v464 = vld [vmem:[#allocation10 + $0x90] sm:$0xff]
    %v465 = vld [vmem:[#allocation10 + $0x98] sm:$0xff]
    %v466 = vld [vmem:[#allocation10 + $0xa0] sm:$0xff]
    %v467 = vld [vmem:[#allocation10 + $0xa8] sm:$0xff]
    %v468 = vld [vmem:[#allocation10 + $0xb0] sm:$0xff]
    %v469 = vld [vmem:[#allocation10 + $0xb8] sm:$0xff]
    %v470 = vld [vmem:[#allocation10 + $0xc0] sm:$0xff]
    %v471 = vld [vmem:[#allocation10 + $0xc8] sm:$0xff]
    %v472 = vld [vmem:[#allocation10 + $0xd0] sm:$0xff]
    %v473 = vld [vmem:[#allocation10 + $0xd8] sm:$0xff]
    %v474 = vld [vmem:[#allocation10 + $0xe0] sm:$0xff]
    %v475 = vld [vmem:[#allocation10 + $0xe8] sm:$0xff]
    %v476 = vld [vmem:[#allocation10 + $0xf0] sm:$0xff]
    %v477 = vld [vmem:[#allocation10 + $0xf8] sm:$0xff]
    %v510 = vunpack.c.l.b16 %v446
    %v511 = vunpack.c.h.b16 %v446
    %v512 = vunpack.c.l.b16 %v447
    %v513 = vunpack.c.h.b16 %v447
    %v514 = vunpack.c.l.b16 %v448
    %v515 = vunpack.c.h.b16 %v448
    %v516 = vunpack.c.l.b16 %v449
    %v517 = vunpack.c.h.b16 %v449
    %v518 = vunpack.c.l.b16 %v450
    %v519 = vunpack.c.h.b16 %v450
    %v520 = vunpack.c.l.b16 %v451
    %v521 = vunpack.c.h.b16 %v451
    %v522 = vunpack.c.l.b16 %v452
    %v523 = vunpack.c.h.b16 %v452
    %v524 = vunpack.c.l.b16 %v453
    %v525 = vunpack.c.h.b16 %v453
    %v526 = vunpack.c.l.b16 %v454
    %v527 = vunpack.c.h.b16 %v454
    %v528 = vunpack.c.l.b16 %v455
    %v529 = vunpack.c.h.b16 %v455
    %v530 = vunpack.c.l.b16 %v456
    %v531 = vunpack.c.h.b16 %v456
    %v532 = vunpack.c.l.b16 %v457
    %v533 = vunpack.c.h.b16 %v457
    %v534 = vunpack.c.l.b16 %v458
    %v535 = vunpack.c.h.b16 %v458
    %v536 = vunpack.c.l.b16 %v459
    %v537 = vunpack.c.h.b16 %v459
    %v538 = vunpack.c.l.b16 %v460
    %v539 = vunpack.c.h.b16 %v460
    %v540 = vunpack.c.l.b16 %v461
    %v541 = vunpack.c.h.b16 %v461
    %v542 = vunpack.c.l.b16 %v462
    %v543 = vunpack.c.h.b16 %v462
    %v544 = vunpack.c.l.b16 %v463
    %v545 = vunpack.c.h.b16 %v463
    %v546 = vunpack.c.l.b16 %v464
    %v547 = vunpack.c.h.b16 %v464
    %v548 = vunpack.c.l.b16 %v465
    %v549 = vunpack.c.h.b16 %v465
    %v550 = vunpack.c.l.b16 %v466
    %v551 = vunpack.c.h.b16 %v466
    %v552 = vunpack.c.l.b16 %v467
    %v553 = vunpack.c.h.b16 %v467
    %v554 = vunpack.c.l.b16 %v468
    %v555 = vunpack.c.h.b16 %v468
    %v556 = vunpack.c.l.b16 %v469
    %v557 = vunpack.c.h.b16 %v469
    %v558 = vunpack.c.l.b16 %v470
    %v559 = vunpack.c.h.b16 %v470
    %v560 = vunpack.c.l.b16 %v471
    %v561 = vunpack.c.h.b16 %v471
    %v562 = vunpack.c.l.b16 %v472
    %v563 = vunpack.c.h.b16 %v472
    %v564 = vunpack.c.l.b16 %v473
    %v565 = vunpack.c.h.b16 %v473
    %v566 = vunpack.c.l.b16 %v474
    %v567 = vunpack.c.h.b16 %v474
    %v568 = vunpack.c.l.b16 %v475
    %v569 = vunpack.c.h.b16 %v475
    %v570 = vunpack.c.l.b16 %v476
    %v571 = vunpack.c.h.b16 %v476
    %v572 = vunpack.c.l.b16 %v477
    %v573 = vunpack.c.h.b16 %v477
    %v574 = vpack.c.b16 %v514, %v510
    %v575 = vpack.c.b16 %v515, %v511
    %v576 = vpack.c.b16 %v516, %v512
    %v577 = vpack.c.b16 %v517, %v513
    %v578 = vpack.c.b16 %v522, %v518
    %v579 = vpack.c.b16 %v523, %v519
    %v580 = vpack.c.b16 %v524, %v520
    %v581 = vpack.c.b16 %v525, %v521
    %v582 = vpack.c.b16 %v530, %v526
    %v583 = vpack.c.b16 %v531, %v527
    %v584 = vpack.c.b16 %v532, %v528
    %v585 = vpack.c.b16 %v533, %v529
    %v586 = vpack.c.b16 %v538, %v534
    %v587 = vpack.c.b16 %v539, %v535
    %v588 = vpack.c.b16 %v540, %v536
    %v589 = vpack.c.b16 %v541, %v537
    %v590 = vpack.c.b16 %v546, %v542
    %v591 = vpack.c.b16 %v547, %v543
    %v592 = vpack.c.b16 %v548, %v544
    %v593 = vpack.c.b16 %v549, %v545
    %v594 = vpack.c.b16 %v554, %v550
    %v595 = vpack.c.b16 %v555, %v551
    %v596 = vpack.c.b16 %v556, %v552
    %v597 = vpack.c.b16 %v557, %v553
    %v598 = vpack.c.b16 %v562, %v558
    %v599 = vpack.c.b16 %v563, %v559
    %v600 = vpack.c.b16 %v564, %v560
    %v601 = vpack.c.b16 %v565, %v561
    %v602 = vpack.c.b16 %v570, %v566
    %v603 = vpack.c.b16 %v571, %v567
    %v604 = vpack.c.b16 %v572, %v568
    %v605 = vpack.c.b16 %v573, %v569
    %638 = vmatprep.subr.bf16.mxu0 %v575
    %639 = vmatpush1.bf16.msra.mxu0 %v574
    %640 = vmatprep.subr.bf16.mxu0 %v579
    %641 = vmatpush1.bf16.msra.mxu0 %v578
    %642 = vmatprep.subr.bf16.mxu0 %v583
    %643 = vmatpush1.bf16.msra.mxu0 %v582
    %644 = vmatprep.subr.bf16.mxu0 %v587
    %645 = vmatpush1.bf16.msra.mxu0 %v586
    %646 = vmatprep.subr.bf16.mxu0 %v591
    %647 = vmatpush1.bf16.msra.mxu0 %v590
    %648 = vmatprep.subr.bf16.mxu0 %v595
    %649 = vmatpush1.bf16.msra.mxu0 %v594
    %650 = vmatprep.subr.bf16.mxu0 %v599
    %651 = vmatpush1.bf16.msra.mxu0 %v598
    %652 = vmatprep.subr.bf16.mxu0 %v603
    %653 = vmatpush1.bf16.msra.mxu0 %v602
    %654 = vmatprep.subr.bf16.mxu0 0
    %655 = vmatpush1.bf16.msra.mxu0 0
    %656 = vmatprep.subr.bf16.mxu0 0
    %657 = vmatpush1.bf16.msra.mxu0 0
    %658 = vmatprep.subr.bf16.mxu0 0
    %659 = vmatpush1.bf16.msra.mxu0 0
    %660 = vmatprep.subr.bf16.mxu0 0
    %661 = vmatpush1.bf16.msra.mxu0 0
    %662 = vmatprep.subr.bf16.mxu0 0
    %663 = vmatpush1.bf16.msra.mxu0 0
    %664 = vmatprep.subr.bf16.mxu0 0
    %665 = vmatpush1.bf16.msra.mxu0 0
    %666 = vmatprep.subr.bf16.mxu0 0
    %667 = vmatpush1.bf16.msra.mxu0 0
    %668 = vmatprep.subr.bf16.mxu0 0
    %669 = vmatpush1.bf16.msra.mxu0 0
    %670 = vmatprep.mubr.bf16.mxu0 0
    %671 = vmatmul.mubr.bf16.gmra.mrb[0].mxu0 0
    %v672 = vpop.f32.mrb[0].mxu0
    %v673 = vadd.f32 0.0, %v672
    %v674 = vpop.f32.mrb[0].mxu0
    %v675 = vadd.f32 0.0, %v674
    %v676 = vpop.f32.mrb[0].mxu0
    %v677 = vpop.f32.mrb[0].mxu0
    %678 = vdwg.mxu0
    %679 = vmatprep.subr.bf16.mxu0 %v577
    %680 = vmatpush1.bf16.msra.mxu0 %v576
    %681 = vmatprep.subr.bf16.mxu0 %v581
    %682 = vmatpush1.bf16.msra.mxu0 %v580
    %683 = vmatprep.subr.bf16.mxu0 %v585
    %684 = vmatpush1.bf16.msra.mxu0 %v584
    %685 = vmatprep.subr.bf16.mxu0 %v589
    %686 = vmatpush1.bf16.msra.mxu0 %v588
    %687 = vmatprep.subr.bf16.mxu0 %v593
    %688 = vmatpush1.bf16.msra.mxu0 %v592
    %689 = vmatprep.subr.bf16.mxu0 %v597
    %690 = vmatpush1.bf16.msra.mxu0 %v596
    %691 = vmatprep.subr.bf16.mxu0 %v601
    %692 = vmatpush1.bf16.msra.mxu0 %v600
    %693 = vmatprep.subr.bf16.mxu0 %v605
    %694 = vmatpush1.bf16.msra.mxu0 %v604
    %695 = vmatprep.subr.bf16.mxu0 0
    %696 = vmatpush1.bf16.msra.mxu0 0
    %697 = vmatprep.subr.bf16.mxu0 0
    %698 = vmatpush1.bf16.msra.mxu0 0
    %699 = vmatprep.subr.bf16.mxu0 0
    %700 = vmatpush1.bf16.msra.mxu0 0
    %701 = vmatprep.subr.bf16.mxu0 0
    %702 = vmatpush1.bf16.msra.mxu0 0
    %703 = vmatprep.subr.bf16.mxu0 0
    %704 = vmatpush1.bf16.msra.mxu0 0
    %705 = vmatprep.subr.bf16.mxu0 0
    %706 = vmatpush1.bf16.msra.mxu0 0
    %707 = vmatprep.subr.bf16.mxu0 0
    %708 = vmatpush1.bf16.msra.mxu0 0
    %709 = vmatprep.subr.bf16.mxu0 0
    %710 = vmatpush1.bf16.msra.mxu0 0
    %711 = vmatprep.mubr.bf16.mxu0 0
    %712 = vmatmul.mubr.bf16.gmra.mrb[0].mxu0 0
    %v713 = vpop.f32.mrb[0].mxu0
    %v714 = vadd.f32 0.0, %v713
    %v715 = vpop.f32.mrb[0].mxu0
    %v716 = vadd.f32 0.0, %v715
    %v717 = vpop.f32.mrb[0].mxu0
    %v718 = vpop.f32.mrb[0].mxu0
    %719 = vdwg.mxu0
    %v724 = vcombine.low %v673, %v675
    %v725 = vcombine.low %v714, %v716
    %v727 = vunpack.c.l.s4 1966171168
    %v728 = vunpack.c.0.s8 %v727
    %v729 = vlaneseq
    %v730 = vshrl.u32 %v729, 7
    %v731 = vsub.s32 %v728, %v730
    %v732 = vrot.slane %v724, %v731
    %v734 = vunpack.c.l.s4 1966171168
    %v735 = vunpack.c.0.s8 %v734
    %v736 = vlaneseq
    %v737 = vshrl.u32 %v736, 7
    %v738 = vsub.s32 %v735, %v737
    %v739 = vrot.slane %v725, %v738
    %v740 = vcombine.low %v732, %v739
    %v742 = vunpack.c.l.s4 1966171168
    %v743 = vunpack.c.0.s8 %v742
    %v744 = vlaneseq
    %v745 = vshrl.u32 %v744, 7
    %v746 = vsub.s32 %v743, %v745
    %v747 = vrot.slane %v740, %v746
    %v749 = vadd.f32 %v445, %v747
    %v750 = vxor.u32 %v749, 2147483648
    %v751 = vmul.f32 %v750, 1.442695
    %v752 = vpow.pop %v751
    %v753 = vadd.f32 %v752, 1.0
    %v754 = vrcp.pop %v753
    %v755 = vmul.f32 1.0, %v754
    %v757 = vrot.slane %v749, 3
    %v759 = vtanh.pop %v757
    %v761 = vrot.slane %v755, 1
    %v763 = vmul.f32 %v761, 0.0
    %v764 = vmul.f32 %v755, %v759
    %v765 = vadd.f32 %v763, %v764
    %v766 = vtanh.pop %v765
    %v767 = vrot.slane %v755, 2
    %v769 = vmul.f32 %v767, %v766
    %s770 = scalar_lea.vmem [#allocation2], 1
    %v771 = vld [vmem:[%s770] ss:$8 sm:$0xf]
    %v772 = vpack.c.bf16 %v769, %v769
    %773 = vmatprep.subr.bf16.mxu0 %v575
    %774 = vmatpush1.bf16.msra.mxu0 %v574
    %775 = vmatprep.subr.bf16.mxu0 %v579
    %776 = vmatpush1.bf16.msra.mxu0 %v578
    %777 = vmatprep.subr.bf16.mxu0 %v583
    %778 = vmatpush1.bf16.msra.mxu0 %v582
    %779 = vmatprep.subr.bf16.mxu0 %v587
    %780 = vmatpush1.bf16.msra.mxu0 %v586
    %781 = vmatprep.subr.bf16.mxu0 %v591
    %782 = vmatpush1.bf16.msra.mxu0 %v590
    %783 = vmatprep.subr.bf16.mxu0 %v595
    %784 = vmatpush1.bf16.msra.mxu0 %v594
    %785 = vmatprep.subr.bf16.mxu0 %v599
    %786 = vmatpush1.bf16.msra.mxu0 %v598
    %787 = vmatprep.subr.bf16.mxu0 %v603
    %788 = vmatpush1.bf16.msra.mxu0 %v602
    %789 = vmatprep.subr.bf16.mxu0 0
    %790 = vmatpush1.bf16.msra.mxu0 0
    %791 = vmatprep.subr.bf16.mxu0 0
    %792 = vmatpush1.bf16.msra.mxu0 0
    %793 = vmatprep.subr.bf16.mxu0 0
    %794 = vmatpush1.bf16.msra.mxu0 0
    %795 = vmatprep.subr.bf16.mxu0 0
    %796 = vmatpush1.bf16.msra.mxu0 0
    %797 = vmatprep.subr.bf16.mxu0 0
    %798 = vmatpush1.bf16.msra.mxu0 0
    %799 = vmatprep.subr.bf16.mxu0 0
    %800 = vmatpush1.bf16.msra.mxu0 0
    %801 = vmatprep.subr.bf16.mxu0 0
    %802 = vmatpush1.bf16.msra.mxu0 0
    %803 = vmatprep.subr.bf16.mxu0 0
    %804 = vmatpush1.bf16.msra.mxu0 0
    %805 = vmatprep.mubr.bf16.mxu0 0
    %806 = vmatmul.mubr.bf16.gmra.mrb[0].mxu0 %v772
    %v807 = vpop.f32.mrb[0].mxu0
    %v808 = vadd.f32 0.0, %v807
    %v809 = vpop.f32.mrb[0].mxu0
    %v810 = vadd.f32 0.0, %v809
    %v811 = vpop.f32.mrb[0].mxu0
    %v812 = vpop.f32.mrb[0].mxu0
    %813 = vdwg.mxu0
    %814 = vmatprep.subr.bf16.mxu0 %v577
    %815 = vmatpush1.bf16.msra.mxu0 %v576
    %816 = vmatprep.subr.bf16.mxu0 %v581
    %817 = vmatpush1.bf16.msra.mxu0 %v580
    %818 = vmatprep.subr.bf16.mxu0 %v585
    %819 = vmatpush1.bf16.msra.mxu0 %v584
    %820 = vmatprep.subr.bf16.mxu0 %v589
    %821 = vmatpush1.bf16.msra.mxu0 %v588
    %822 = vmatprep.subr.bf16.mxu0 %v593
    %823 = vmatpush1.bf16.msra.mxu0 %v592
    %824 = vmatprep.subr.bf16.mxu0 %v597
    %825 = vmatpush1.bf16.msra.mxu0 %v596
    %826 = vmatprep.subr.bf16.mxu0 %v601
    %827 = vmatpush1.bf16.msra.mxu0 %v600
    %828 = vmatprep.subr.bf16.mxu0 %v605
    %829 = vmatpush1.bf16.msra.mxu0 %v604
    %830 = vmatprep.subr.bf16.mxu0 0
    %831 = vmatpush1.bf16.msra.mxu0 0
    %832 = vmatprep.subr.bf16.mxu0 0
    %833 = vmatpush1.bf16.msra.mxu0 0
    %834 = vmatprep.subr.bf16.mxu0 0
    %835 = vmatpush1.bf16.msra.mxu0 0
    %836 = vmatprep.subr.bf16.mxu0 0
    %837 = vmatpush1.bf16.msra.mxu0 0
    %838 = vmatprep.subr.bf16.mxu0 0
    %839 = vmatpush1.bf16.msra.mxu0 0
    %840 = vmatprep.subr.bf16.mxu0 0
    %841 = vmatpush1.bf16.msra.mxu0 0
    %842 = vmatprep.subr.bf16.mxu0 0
    %843 = vmatpush1.bf16.msra.mxu0 0
    %844 = vmatprep.subr.bf16.mxu0 0
    %845 = vmatpush1.bf16.msra.mxu0 0
    %846 = vmatprep.mubr.bf16.mxu0 0
    %847 = vmatmul.mubr.bf16.gmra.mrb[0].mxu0 %v772
    %v848 = vpop.f32.mrb[0].mxu0
    %v849 = vadd.f32 0.0, %v848
    %v850 = vpop.f32.mrb[0].mxu0
    %v851 = vadd.f32 0.0, %v850
    %v852 = vpop.f32.mrb[0].mxu0
    %v853 = vpop.f32.mrb[0].mxu0
    %854 = vdwg.mxu0
    %v859 = vcombine.low %v808, %v810
    %v860 = vcombine.low %v849, %v851
    %v862 = vunpack.c.l.s4 1966171168
    %v863 = vunpack.c.0.s8 %v862
    %v864 = vlaneseq
    %v865 = vshrl.u32 %v864, 7
    %v866 = vsub.s32 %v863, %v865
    %v867 = vrot.slane %v859, %v866
    %v869 = vunpack.c.l.s4 1966171168
    %v870 = vunpack.c.0.s8 %v869
    %v871 = vlaneseq
    %v872 = vshrl.u32 %v871, 7
    %v873 = vsub.s32 %v870, %v872
    %v874 = vrot.slane %v860, %v873
    %v875 = vcombine.low %v867, %v874
    %v877 = vunpack.c.l.s4 1966171168
    %v878 = vunpack.c.0.s8 %v877
    %v879 = vlaneseq
    %v880 = vshrl.u32 %v879, 7
    %v881 = vsub.s32 %v878, %v880
    %v882 = vrot.slane %v875, %v881
    %v884 = vadd.f32 %v771, %v882
    %v885 = vxor.u32 %v884, 2147483648
    %v886 = vmul.f32 %v885, 1.442695
    %v887 = vpow.pop %v886
    %v888 = vadd.f32 %v887, 1.0
    %v889 = vrcp.pop %v888
    %v890 = vmul.f32 1.0, %v889
    %v892 = vrot.slane %v884, 3
    %v894 = vtanh.pop %v892
    %v896 = vrot.slane %v890, 1
    %v898 = vmul.f32 %v896, %v765
    %v899 = vmul.f32 %v890, %v894
    %v900 = vadd.f32 %v898, %v899
    %v901 = vtanh.pop %v900
    %v902 = vrot.slane %v890, 2
    %v904 = vmul.f32 %v902, %v901
    %s905 = scalar_lea.vmem [#allocation2], 2
    %v906 = vld [vmem:[%s905] ss:$8 sm:$0xf]
    %v907 = vpack.c.bf16 %v904, %v904
    %908 = vmatprep.subr.bf16.mxu0 %v575
    %909 = vmatpush1.bf16.msra.mxu0 %v574
    %910 = vmatprep.subr.bf16.mxu0 %v579
    %911 = vmatpush1.bf16.msra.mxu0 %v578
    %912 = vmatprep.subr.bf16.mxu0 %v583
    %913 = vmatpush1.bf16.msra.mxu0 %v582
    %914 = vmatprep.subr.bf16.mxu0 %v587
    %915 = vmatpush1.bf16.msra.mxu0 %v586
    %916 = vmatprep.subr.bf16.mxu0 %v591
    %917 = vmatpush1.bf16.msra.mxu0 %v590
    %918 = vmatprep.subr.bf16.mxu0 %v595
    %919 = vmatpush1.bf16.msra.mxu0 %v594
    %920 = vmatprep.subr.bf16.mxu0 %v599
    %921 = vmatpush1.bf16.msra.mxu0 %v598
    %922 = vmatprep.subr.bf16.mxu0 %v603
    %923 = vmatpush1.bf16.msra.mxu0 %v602
    %924 = vmatprep.subr.bf16.mxu0 0
    %925 = vmatpush1.bf16.msra.mxu0 0
    %926 = vmatprep.subr.bf16.mxu0 0
    %927 = vmatpush1.bf16.msra.mxu0 0
    %928 = vmatprep.subr.bf16.mxu0 0
    %929 = vmatpush1.bf16.msra.mxu0 0
    %930 = vmatprep.subr.bf16.mxu0 0
    %931 = vmatpush1.bf16.msra.mxu0 0
    %932 = vmatprep.subr.bf16.mxu0 0
    %933 = vmatpush1.bf16.msra.mxu0 0
    %934 = vmatprep.subr.bf16.mxu0 0
    %935 = vmatpush1.bf16.msra.mxu0 0
    %936 = vmatprep.subr.bf16.mxu0 0
    %937 = vmatpush1.bf16.msra.mxu0 0
    %938 = vmatprep.subr.bf16.mxu0 0
    %939 = vmatpush1.bf16.msra.mxu0 0
    %940 = vmatprep.mubr.bf16.mxu0 0
    %941 = vmatmul.mubr.bf16.gmra.mrb[0].mxu0 %v907
    %v942 = vpop.f32.mrb[0].mxu0
    %v943 = vadd.f32 0.0, %v942
    %v944 = vpop.f32.mrb[0].mxu0
    %v945 = vadd.f32 0.0, %v944
    %v946 = vpop.f32.mrb[0].mxu0
    %v947 = vpop.f32.mrb[0].mxu0
    %948 = vdwg.mxu0
    %949 = vmatprep.subr.bf16.mxu0 %v577
    %950 = vmatpush1.bf16.msra.mxu0 %v576
    %951 = vmatprep.subr.bf16.mxu0 %v581
    %952 = vmatpush1.bf16.msra.mxu0 %v580
    %953 = vmatprep.subr.bf16.mxu0 %v585
    %954 = vmatpush1.bf16.msra.mxu0 %v584
    %955 = vmatprep.subr.bf16.mxu0 %v589
    %956 = vmatpush1.bf16.msra.mxu0 %v588
    %957 = vmatprep.subr.bf16.mxu0 %v593
    %958 = vmatpush1.bf16.msra.mxu0 %v592
    %959 = vmatprep.subr.bf16.mxu0 %v597
    %960 = vmatpush1.bf16.msra.mxu0 %v596
    %961 = vmatprep.subr.bf16.mxu0 %v601
    %962 = vmatpush1.bf16.msra.mxu0 %v600
    %963 = vmatprep.subr.bf16.mxu0 %v605
    %964 = vmatpush1.bf16.msra.mxu0 %v604
    %965 = vmatprep.subr.bf16.mxu0 0
    %966 = vmatpush1.bf16.msra.mxu0 0
    %967 = vmatprep.subr.bf16.mxu0 0
    %968 = vmatpush1.bf16.msra.mxu0 0
    %969 = vmatprep.subr.bf16.mxu0 0
    %970 = vmatpush1.bf16.msra.mxu0 0
    %971 = vmatprep.subr.bf16.mxu0 0
    %972 = vmatpush1.bf16.msra.mxu0 0
    %973 = vmatprep.subr.bf16.mxu0 0
    %974 = vmatpush1.bf16.msra.mxu0 0
    %975 = vmatprep.subr.bf16.mxu0 0
    %976 = vmatpush1.bf16.msra.mxu0 0
    %977 = vmatprep.subr.bf16.mxu0 0
    %978 = vmatpush1.bf16.msra.mxu0 0
    %979 = vmatprep.subr.bf16.mxu0 0
    %980 = vmatpush1.bf16.msra.mxu0 0
    %981 = vmatprep.mubr.bf16.mxu0 0
    %982 = vmatmul.mubr.bf16.gmra.mrb[0].mxu0 %v907
    %v983 = vpop.f32.mrb[0].mxu0
    %v984 = vadd.f32 0.0, %v983
    %v985 = vpop.f32.mrb[0].mxu0
    %v986 = vadd.f32 0.0, %v985
    %v987 = vpop.f32.mrb[0].mxu0
    %v988 = vpop.f32.mrb[0].mxu0
    %989 = vdwg.mxu0
    %v994 = vcombine.low %v943, %v945
    %v995 = vcombine.low %v984, %v986
    %v997 = vunpack.c.l.s4 1966171168
    %v998 = vunpack.c.0.s8 %v997
    %v999 = vlaneseq
    %v1000 = vshrl.u32 %v999, 7
    %v1001 = vsub.s32 %v998, %v1000
    %v1002 = vrot.slane %v994, %v1001
    %v1004 = vunpack.c.l.s4 1966171168
    %v1005 = vunpack.c.0.s8 %v1004
    %v1006 = vlaneseq
    %v1007 = vshrl.u32 %v1006, 7
    %v1008 = vsub.s32 %v1005, %v1007
    %v1009 = vrot.slane %v995, %v1008
    %v1010 = vcombine.low %v1002, %v1009
    %v1012 = vunpack.c.l.s4 1966171168
    %v1013 = vunpack.c.0.s8 %v1012
    %v1014 = vlaneseq
    %v1015 = vshrl.u32 %v1014, 7
    %v1016 = vsub.s32 %v1013, %v1015
    %v1017 = vrot.slane %v1010, %v1016
    %v1019 = vadd.f32 %v906, %v1017
    %v1020 = vxor.u32 %v1019, 2147483648
    %v1021 = vmul.f32 %v1020, 1.442695
    %v1022 = vpow.pop %v1021
    %v1023 = vadd.f32 %v1022, 1.0
    %v1024 = vrcp.pop %v1023
    %v1025 = vmul.f32 1.0, %v1024
    %v1027 = vrot.slane %v1019, 3
    %v1029 = vtanh.pop %v1027
    %v1031 = vrot.slane %v1025, 1
    %v1033 = vmul.f32 %v1031, %v900
    %v1034 = vmul.f32 %v1025, %v1029
    %v1035 = vadd.f32 %v1033, %v1034
    %v1036 = vtanh.pop %v1035
    %v1037 = vrot.slane %v1025, 2
    %v1039 = vmul.f32 %v1037, %v1036
    %s1040 = scalar_lea.vmem [#allocation2], 3
    %v1041 = vld [vmem:[%s1040] ss:$8 sm:$0xf]
    %v1042 = vpack.c.bf16 %v1039, %v1039
    %1043 = vmatprep.subr.bf16.mxu0 %v575
    %1044 = vmatpush1.bf16.msra.mxu0 %v574
    %1045 = vmatprep.subr.bf16.mxu0 %v579
    %1046 = vmatpush1.bf16.msra.mxu0 %v578
    %1047 = vmatprep.subr.bf16.mxu0 %v583
    %1048 = vmatpush1.bf16.msra.mxu0 %v582
    %1049 = vmatprep.subr.bf16.mxu0 %v587
    %1050 = vmatpush1.bf16.msra.mxu0 %v586
    %1051 = vmatprep.subr.bf16.mxu0 %v591
    %1052 = vmatpush1.bf16.msra.mxu0 %v590
    %1053 = vmatprep.subr.bf16.mxu0 %v595
    %1054 = vmatpush1.bf16.msra.mxu0 %v594
    %1055 = vmatprep.subr.bf16.mxu0 %v599
    %1056 = vmatpush1.bf16.msra.mxu0 %v598
    %1057 = vmatprep.subr.bf16.mxu0 %v603
    %1058 = vmatpush1.bf16.msra.mxu0 %v602
    %1059 = vmatprep.subr.bf16.mxu0 0
    %1060 = vmatpush1.bf16.msra.mxu0 0
    %1061 = vmatprep.subr.bf16.mxu0 0
    %1062 = vmatpush1.bf16.msra.mxu0 0
    %1063 = vmatprep.subr.bf16.mxu0 0
    %1064 = vmatpush1.bf16.msra.mxu0 0
    %1065 = vmatprep.subr.bf16.mxu0 0
    %1066 = vmatpush1.bf16.msra.mxu0 0
    %1067 = vmatprep.subr.bf16.mxu0 0
    %1068 = vmatpush1.bf16.msra.mxu0 0
    %1069 = vmatprep.subr.bf16.mxu0 0
    %1070 = vmatpush1.bf16.msra.mxu0 0
    %1071 = vmatprep.subr.bf16.mxu0 0
    %1072 = vmatpush1.bf16.msra.mxu0 0
    %1073 = vmatprep.subr.bf16.mxu0 0
    %1074 = vmatpush1.bf16.msra.mxu0 0
    %1075 = vmatprep.mubr.bf16.mxu0 0
    %1076 = vmatmul.mubr.bf16.gmra.mrb[0].mxu0 %v1042
    %v1077 = vpop.f32.mrb[0].mxu0
    %v1078 = vadd.f32 0.0, %v1077
    %v1079 = vpop.f32.mrb[0].mxu0
    %v1080 = vadd.f32 0.0, %v1079
    %v1081 = vpop.f32.mrb[0].mxu0
    %v1082 = vpop.f32.mrb[0].mxu0
    %1083 = vdwg.mxu0
    %1084 = vmatprep.subr.bf16.mxu0 %v577
    %1085 = vmatpush1.bf16.msra.mxu0 %v576
    %1086 = vmatprep.subr.bf16.mxu0 %v581
    %1087 = vmatpush1.bf16.msra.mxu0 %v580
    %1088 = vmatprep.subr.bf16.mxu0 %v585
    %1089 = vmatpush1.bf16.msra.mxu0 %v584
    %1090 = vmatprep.subr.bf16.mxu0 %v589
    %1091 = vmatpush1.bf16.msra.mxu0 %v588
    %1092 = vmatprep.subr.bf16.mxu0 %v593
    %1093 = vmatpush1.bf16.msra.mxu0 %v592
    %1094 = vmatprep.subr.bf16.mxu0 %v597
    %1095 = vmatpush1.bf16.msra.mxu0 %v596
    %1096 = vmatprep.subr.bf16.mxu0 %v601
    %1097 = vmatpush1.bf16.msra.mxu0 %v600
    %1098 = vmatprep.subr.bf16.mxu0 %v605
    %1099 = vmatpush1.bf16.msra.mxu0 %v604
    %1100 = vmatprep.subr.bf16.mxu0 0
    %1101 = vmatpush1.bf16.msra.mxu0 0
    %1102 = vmatprep.subr.bf16.mxu0 0
    %1103 = vmatpush1.bf16.msra.mxu0 0
    %1104 = vmatprep.subr.bf16.mxu0 0
    %1105 = vmatpush1.bf16.msra.mxu0 0
    %1106 = vmatprep.subr.bf16.mxu0 0
    %1107 = vmatpush1.bf16.msra.mxu0 0
    %1108 = vmatprep.subr.bf16.mxu0 0
    %1109 = vmatpush1.bf16.msra.mxu0 0
    %1110 = vmatprep.subr.bf16.mxu0 0
    %1111 = vmatpush1.bf16.msra.mxu0 0
    %1112 = vmatprep.subr.bf16.mxu0 0
    %1113 = vmatpush1.bf16.msra.mxu0 0
    %1114 = vmatprep.subr.bf16.mxu0 0
    %1115 = vmatpush1.bf16.msra.mxu0 0
    %1116 = vmatprep.mubr.bf16.mxu0 0
    %1117 = vmatmul.mubr.bf16.gmra.mrb[0].mxu0 %v1042
    %v1118 = vpop.f32.mrb[0].mxu0
    %v1119 = vadd.f32 0.0, %v1118
    %v1120 = vpop.f32.mrb[0].mxu0
    %v1121 = vadd.f32 0.0, %v1120
    %v1122 = vpop.f32.mrb[0].mxu0
    %v1123 = vpop.f32.mrb[0].mxu0
    %1124 = vdwg.mxu0
    %v1129 = vcombine.low %v1078, %v1080
    %v1130 = vcombine.low %v1119, %v1121
    %v1132 = vunpack.c.l.s4 1966171168
    %v1133 = vunpack.c.0.s8 %v1132
    %v1134 = vlaneseq
    %v1135 = vshrl.u32 %v1134, 7
    %v1136 = vsub.s32 %v1133, %v1135
    %v1137 = vrot.slane %v1129, %v1136
    %v1139 = vunpack.c.l.s4 1966171168
    %v1140 = vunpack.c.0.s8 %v1139
    %v1141 = vlaneseq
    %v1142 = vshrl.u32 %v1141, 7
    %v1143 = vsub.s32 %v1140, %v1142
    %v1144 = vrot.slane %v1130, %v1143
    %v1145 = vcombine.low %v1137, %v1144
    %v1147 = vunpack.c.l.s4 1966171168
    %v1148 = vunpack.c.0.s8 %v1147
    %v1149 = vlaneseq
    %v1150 = vshrl.u32 %v1149, 7
    %v1151 = vsub.s32 %v1148, %v1150
    %v1152 = vrot.slane %v1145, %v1151
    %v1154 = vadd.f32 %v1041, %v1152
    %v1155 = vxor.u32 %v1154, 2147483648
    %v1156 = vmul.f32 %v1155, 1.442695
    %v1157 = vpow.pop %v1156
    %v1158 = vadd.f32 %v1157, 1.0
    %v1159 = vrcp.pop %v1158
    %v1160 = vmul.f32 1.0, %v1159
    %v1162 = vrot.slane %v1154, 3
    %v1164 = vtanh.pop %v1162
    %v1166 = vrot.slane %v1160, 1
    %v1168 = vmul.f32 %v1166, %v1035
    %v1169 = vmul.f32 %v1160, %v1164
    %v1170 = vadd.f32 %v1168, %v1169
    %v1171 = vtanh.pop %v1170
    %v1172 = vrot.slane %v1160, 2
    %v1174 = vmul.f32 %v1172, %v1171
    %s1175 = scalar_lea.vmem [#allocation2], 4
    %v1176 = vld [vmem:[%s1175] ss:$8 sm:$0xf]
    %v1177 = vpack.c.bf16 %v1174, %v1174
    %1178 = vmatprep.subr.bf16.mxu0 %v575
    %1179 = vmatpush1.bf16.msra.mxu0 %v574
    %1180 = vmatprep.subr.bf16.mxu0 %v579
    %1181 = vmatpush1.bf16.msra.mxu0 %v578
    %1182 = vmatprep.subr.bf16.mxu0 %v583
    %1183 = vmatpush1.bf16.msra.mxu0 %v582
    %1184 = vmatprep.subr.bf16.mxu0 %v587
    %1185 = vmatpush1.bf16.msra.mxu0 %v586
    %1186 = vmatprep.subr.bf16.mxu0 %v591
    %1187 = vmatpush1.bf16.msra.mxu0 %v590
    %1188 = vmatprep.subr.bf16.mxu0 %v595
    %1189 = vmatpush1.bf16.msra.mxu0 %v594
    %1190 = vmatprep.subr.bf16.mxu0 %v599
    %1191 = vmatpush1.bf16.msra.mxu0 %v598
    %1192 = vmatprep.subr.bf16.mxu0 %v603
    %1193 = vmatpush1.bf16.msra.mxu0 %v602
    %1194 = vmatprep.subr.bf16.mxu0 0
    %1195 = vmatpush1.bf16.msra.mxu0 0
    %1196 = vmatprep.subr.bf16.mxu0 0
    %1197 = vmatpush1.bf16.msra.mxu0 0
    %1198 = vmatprep.subr.bf16.mxu0 0
    %1199 = vmatpush1.bf16.msra.mxu0 0
    %1200 = vmatprep.subr.bf16.mxu0 0
    %1201 = vmatpush1.bf16.msra.mxu0 0
    %1202 = vmatprep.subr.bf16.mxu0 0
    %1203 = vmatpush1.bf16.msra.mxu0 0
    %1204 = vmatprep.subr.bf16.mxu0 0
    %1205 = vmatpush1.bf16.msra.mxu0 0
    %1206 = vmatprep.subr.bf16.mxu0 0
    %1207 = vmatpush1.bf16.msra.mxu0 0
    %1208 = vmatprep.subr.bf16.mxu0 0
    %1209 = vmatpush1.bf16.msra.mxu0 0
    %1210 = vmatprep.mubr.bf16.mxu0 0
    %1211 = vmatmul.mubr.bf16.gmra.mrb[0].mxu0 %v1177
    %v1212 = vpop.f32.mrb[0].mxu0
    %v1213 = vadd.f32 0.0, %v1212
    %v1214 = vpop.f32.mrb[0].mxu0
    %v1215 = vadd.f32 0.0, %v1214
    %v1216 = vpop.f32.mrb[0].mxu0
    %v1217 = vpop.f32.mrb[0].mxu0
    %1218 = vdwg.mxu0
    %1219 = vmatprep.subr.bf16.mxu0 %v577
    %1220 = vmatpush1.bf16.msra.mxu0 %v576
    %1221 = vmatprep.subr.bf16.mxu0 %v581
    %1222 = vmatpush1.bf16.msra.mxu0 %v580
    %1223 = vmatprep.subr.bf16.mxu0 %v585
    %1224 = vmatpush1.bf16.msra.mxu0 %v584
    %1225 = vmatprep.subr.bf16.mxu0 %v589
    %1226 = vmatpush1.bf16.msra.mxu0 %v588
    %1227 = vmatprep.subr.bf16.mxu0 %v593
    %1228 = vmatpush1.bf16.msra.mxu0 %v592
    %1229 = vmatprep.subr.bf16.mxu0 %v597
    %1230 = vmatpush1.bf16.msra.mxu0 %v596
    %1231 = vmatprep.subr.bf16.mxu0 %v601
    %1232 = vmatpush1.bf16.msra.mxu0 %v600
    %1233 = vmatprep.subr.bf16.mxu0 %v605
    %1234 = vmatpush1.bf16.msra.mxu0 %v604
    %1235 = vmatprep.subr.bf16.mxu0 0
    %1236 = vmatpush1.bf16.msra.mxu0 0
    %1237 = vmatprep.subr.bf16.mxu0 0
    %1238 = vmatpush1.bf16.msra.mxu0 0
    %1239 = vmatprep.subr.bf16.mxu0 0
    %1240 = vmatpush1.bf16.msra.mxu0 0
    %1241 = vmatprep.subr.bf16.mxu0 0
    %1242 = vmatpush1.bf16.msra.mxu0 0
    %1243 = vmatprep.subr.bf16.mxu0 0
    %1244 = vmatpush1.bf16.msra.mxu0 0
    %1245 = vmatprep.subr.bf16.mxu0 0
    %1246 = vmatpush1.bf16.msra.mxu0 0
    %1247 = vmatprep.subr.bf16.mxu0 0
    %1248 = vmatpush1.bf16.msra.mxu0 0
    %1249 = vmatprep.subr.bf16.mxu0 0
    %1250 = vmatpush1.bf16.msra.mxu0 0
    %1251 = vmatprep.mubr.bf16.mxu0 0
    %1252 = vmatmul.mubr.bf16.gmra.mrb[0].mxu0 %v1177
    %v1253 = vpop.f32.mrb[0].mxu0
    %v1254 = vadd.f32 0.0, %v1253
    %v1255 = vpop.f32.mrb[0].mxu0
    %v1256 = vadd.f32 0.0, %v1255
    %v1257 = vpop.f32.mrb[0].mxu0
    %v1258 = vpop.f32.mrb[0].mxu0
    %1259 = vdwg.mxu0
    %v1264 = vcombine.low %v1213, %v1215
    %v1265 = vcombine.low %v1254, %v1256
    %v1267 = vunpack.c.l.s4 1966171168
    %v1268 = vunpack.c.0.s8 %v1267
    %v1269 = vlaneseq
    %v1270 = vshrl.u32 %v1269, 7
    %v1271 = vsub.s32 %v1268, %v1270
    %v1272 = vrot.slane %v1264, %v1271
    %v1274 = vunpack.c.l.s4 1966171168
    %v1275 = vunpack.c.0.s8 %v1274
    %v1276 = vlaneseq
    %v1277 = vshrl.u32 %v1276, 7
    %v1278 = vsub.s32 %v1275, %v1277
    %v1279 = vrot.slane %v1265, %v1278
    %v1280 = vcombine.low %v1272, %v1279
    %v1282 = vunpack.c.l.s4 1966171168
    %v1283 = vunpack.c.0.s8 %v1282
    %v1284 = vlaneseq
    %v1285 = vshrl.u32 %v1284, 7
    %v1286 = vsub.s32 %v1283, %v1285
    %v1287 = vrot.slane %v1280, %v1286
    %v1289 = vadd.f32 %v1176, %v1287
    %v1290 = vxor.u32 %v1289, 2147483648
    %v1291 = vmul.f32 %v1290, 1.442695
    %v1292 = vpow.pop %v1291
    %v1293 = vadd.f32 %v1292, 1.0
    %v1294 = vrcp.pop %v1293
    %v1295 = vmul.f32 1.0, %v1294
    %v1297 = vrot.slane %v1289, 3
    %v1299 = vtanh.pop %v1297
    %v1301 = vrot.slane %v1295, 1
    %v1303 = vmul.f32 %v1301, %v1170
    %v1304 = vmul.f32 %v1295, %v1299
    %v1305 = vadd.f32 %v1303, %v1304
    %v1306 = vtanh.pop %v1305
    %v1307 = vrot.slane %v1295, 2
    %v1309 = vmul.f32 %v1307, %v1306
    %s1310 = scalar_lea.vmem [#allocation2], 5
    %v1311 = vld [vmem:[%s1310] ss:$8 sm:$0xf]
    %v1312 = vpack.c.bf16 %v1309, %v1309
    %1313 = vmatprep.subr.bf16.mxu0 %v575
    %1314 = vmatpush1.bf16.msra.mxu0 %v574
    %1315 = vmatprep.subr.bf16.mxu0 %v579
    %1316 = vmatpush1.bf16.msra.mxu0 %v578
    %1317 = vmatprep.subr.bf16.mxu0 %v583
    %1318 = vmatpush1.bf16.msra.mxu0 %v582
    %1319 = vmatprep.subr.bf16.mxu0 %v587
    %1320 = vmatpush1.bf16.msra.mxu0 %v586
    %1321 = vmatprep.subr.bf16.mxu0 %v591
    %1322 = vmatpush1.bf16.msra.mxu0 %v590
    %1323 = vmatprep.subr.bf16.mxu0 %v595
    %1324 = vmatpush1.bf16.msra.mxu0 %v594
    %1325 = vmatprep.subr.bf16.mxu0 %v599
    %1326 = vmatpush1.bf16.msra.mxu0 %v598
    %1327 = vmatprep.subr.bf16.mxu0 %v603
    %1328 = vmatpush1.bf16.msra.mxu0 %v602
    %1329 = vmatprep.subr.bf16.mxu0 0
    %1330 = vmatpush1.bf16.msra.mxu0 0
    %1331 = vmatprep.subr.bf16.mxu0 0
    %1332 = vmatpush1.bf16.msra.mxu0 0
    %1333 = vmatprep.subr.bf16.mxu0 0
    %1334 = vmatpush1.bf16.msra.mxu0 0
    %1335 = vmatprep.subr.bf16.mxu0 0
    %1336 = vmatpush1.bf16.msra.mxu0 0
    %1337 = vmatprep.subr.bf16.mxu0 0
    %1338 = vmatpush1.bf16.msra.mxu0 0
    %1339 = vmatprep.subr.bf16.mxu0 0
    %1340 = vmatpush1.bf16.msra.mxu0 0
    %1341 = vmatprep.subr.bf16.mxu0 0
    %1342 = vmatpush1.bf16.msra.mxu0 0
    %1343 = vmatprep.subr.bf16.mxu0 0
    %1344 = vmatpush1.bf16.msra.mxu0 0
    %1345 = vmatprep.mubr.bf16.mxu0 0
    %1346 = vmatmul.mubr.bf16.gmra.mrb[0].mxu0 %v1312
    %v1347 = vpop.f32.mrb[0].mxu0
    %v1348 = vadd.f32 0.0, %v1347
    %v1349 = vpop.f32.mrb[0].mxu0
    %v1350 = vadd.f32 0.0, %v1349
    %v1351 = vpop.f32.mrb[0].mxu0
    %v1352 = vpop.f32.mrb[0].mxu0
    %1353 = vdwg.mxu0
    %1354 = vmatprep.subr.bf16.mxu0 %v577
    %1355 = vmatpush1.bf16.msra.mxu0 %v576
    %1356 = vmatprep.subr.bf16.mxu0 %v581
    %1357 = vmatpush1.bf16.msra.mxu0 %v580
    %1358 = vmatprep.subr.bf16.mxu0 %v585
    %1359 = vmatpush1.bf16.msra.mxu0 %v584
    %1360 = vmatprep.subr.bf16.mxu0 %v589
    %1361 = vmatpush1.bf16.msra.mxu0 %v588
    %1362 = vmatprep.subr.bf16.mxu0 %v593
    %1363 = vmatpush1.bf16.msra.mxu0 %v592
    %1364 = vmatprep.subr.bf16.mxu0 %v597
    %1365 = vmatpush1.bf16.msra.mxu0 %v596
    %1366 = vmatprep.subr.bf16.mxu0 %v601
    %1367 = vmatpush1.bf16.msra.mxu0 %v600
    %1368 = vmatprep.subr.bf16.mxu0 %v605
    %1369 = vmatpush1.bf16.msra.mxu0 %v604
    %1370 = vmatprep.subr.bf16.mxu0 0
    %1371 = vmatpush1.bf16.msra.mxu0 0
    %1372 = vmatprep.subr.bf16.mxu0 0
    %1373 = vmatpush1.bf16.msra.mxu0 0
    %1374 = vmatprep.subr.bf16.mxu0 0
    %1375 = vmatpush1.bf16.msra.mxu0 0
    %1376 = vmatprep.subr.bf16.mxu0 0
    %1377 = vmatpush1.bf16.msra.mxu0 0
    %1378 = vmatprep.subr.bf16.mxu0 0
    %1379 = vmatpush1.bf16.msra.mxu0 0
    %1380 = vmatprep.subr.bf16.mxu0 0
    %1381 = vmatpush1.bf16.msra.mxu0 0
    %1382 = vmatprep.subr.bf16.mxu0 0
    %1383 = vmatpush1.bf16.msra.mxu0 0
    %1384 = vmatprep.subr.bf16.mxu0 0
    %1385 = vmatpush1.bf16.msra.mxu0 0
    %1386 = vmatprep.mubr.bf16.mxu0 0
    %1387 = vmatmul.mubr.bf16.gmra.mrb[0].mxu0 %v1312
    %v1388 = vpop.f32.mrb[0].mxu0
    %v1389 = vadd.f32 0.0, %v1388
    %v1390 = vpop.f32.mrb[0].mxu0
    %v1391 = vadd.f32 0.0, %v1390
    %v1392 = vpop.f32.mrb[0].mxu0
    %v1393 = vpop.f32.mrb[0].mxu0
    %1394 = vdwg.mxu0
    %v1399 = vcombine.low %v1348, %v1350
    %v1400 = vcombine.low %v1389, %v1391
    %v1402 = vunpack.c.l.s4 1966171168
    %v1403 = vunpack.c.0.s8 %v1402
    %v1404 = vlaneseq
    %v1405 = vshrl.u32 %v1404, 7
    %v1406 = vsub.s32 %v1403, %v1405
    %v1407 = vrot.slane %v1399, %v1406
    %v1409 = vunpack.c.l.s4 1966171168
    %v1410 = vunpack.c.0.s8 %v1409
    %v1411 = vlaneseq
    %v1412 = vshrl.u32 %v1411, 7
    %v1413 = vsub.s32 %v1410, %v1412
    %v1414 = vrot.slane %v1400, %v1413
    %v1415 = vcombine.low %v1407, %v1414
    %v1417 = vunpack.c.l.s4 1966171168
    %v1418 = vunpack.c.0.s8 %v1417
    %v1419 = vlaneseq
    %v1420 = vshrl.u32 %v1419, 7
    %v1421 = vsub.s32 %v1418, %v1420
    %v1422 = vrot.slane %v1415, %v1421
    %v1424 = vadd.f32 %v1311, %v1422
    %v1425 = vxor.u32 %v1424, 2147483648
    %v1426 = vmul.f32 %v1425, 1.442695
    %v1427 = vpow.pop %v1426
    %v1428 = vadd.f32 %v1427, 1.0
    %v1429 = vrcp.pop %v1428
    %v1430 = vmul.f32 1.0, %v1429
    %v1432 = vrot.slane %v1424, 3
    %v1434 = vtanh.pop %v1432
    %v1436 = vrot.slane %v1430, 1
    %v1438 = vmul.f32 %v1436, %v1305
    %v1439 = vmul.f32 %v1430, %v1434
    %v1440 = vadd.f32 %v1438, %v1439
    %v1441 = vtanh.pop %v1440
    %v1442 = vrot.slane %v1430, 2
    %v1444 = vmul.f32 %v1442, %v1441
    %s1445 = scalar_lea.vmem [#allocation2], 6
    %v1446 = vld [vmem:[%s1445] ss:$8 sm:$0xf]
    %v1447 = vpack.c.bf16 %v1444, %v1444
    %1448 = vmatprep.subr.bf16.mxu0 %v575
    %1449 = vmatpush1.bf16.msra.mxu0 %v574
    %1450 = vmatprep.subr.bf16.mxu0 %v579
    %1451 = vmatpush1.bf16.msra.mxu0 %v578
    %1452 = vmatprep.subr.bf16.mxu0 %v583
    %1453 = vmatpush1.bf16.msra.mxu0 %v582
    %1454 = vmatprep.subr.bf16.mxu0 %v587
    %1455 = vmatpush1.bf16.msra.mxu0 %v586
    %1456 = vmatprep.subr.bf16.mxu0 %v591
    %1457 = vmatpush1.bf16.msra.mxu0 %v590
    %1458 = vmatprep.subr.bf16.mxu0 %v595
    %1459 = vmatpush1.bf16.msra.mxu0 %v594
    %1460 = vmatprep.subr.bf16.mxu0 %v599
    %1461 = vmatpush1.bf16.msra.mxu0 %v598
    %1462 = vmatprep.subr.bf16.mxu0 %v603
    %1463 = vmatpush1.bf16.msra.mxu0 %v602
    %1464 = vmatprep.subr.bf16.mxu0 0
    %1465 = vmatpush1.bf16.msra.mxu0 0
    %1466 = vmatprep.subr.bf16.mxu0 0
    %1467 = vmatpush1.bf16.msra.mxu0 0
    %1468 = vmatprep.subr.bf16.mxu0 0
    %1469 = vmatpush1.bf16.msra.mxu0 0
    %1470 = vmatprep.subr.bf16.mxu0 0
    %1471 = vmatpush1.bf16.msra.mxu0 0
    %1472 = vmatprep.subr.bf16.mxu0 0
    %1473 = vmatpush1.bf16.msra.mxu0 0
    %1474 = vmatprep.subr.bf16.mxu0 0
    %1475 = vmatpush1.bf16.msra.mxu0 0
    %1476 = vmatprep.subr.bf16.mxu0 0
    %1477 = vmatpush1.bf16.msra.mxu0 0
    %1478 = vmatprep.subr.bf16.mxu0 0
    %1479 = vmatpush1.bf16.msra.mxu0 0
    %1480 = vmatprep.mubr.bf16.mxu0 0
    %1481 = vmatmul.mubr.bf16.gmra.mrb[0].mxu0 %v1447
    %v1482 = vpop.f32.mrb[0].mxu0
    %v1483 = vadd.f32 0.0, %v1482
    %v1484 = vpop.f32.mrb[0].mxu0
    %v1485 = vadd.f32 0.0, %v1484
    %v1486 = vpop.f32.mrb[0].mxu0
    %v1487 = vpop.f32.mrb[0].mxu0
    %1488 = vdwg.mxu0
    %1489 = vmatprep.subr.bf16.mxu0 %v577
    %1490 = vmatpush1.bf16.msra.mxu0 %v576
    %1491 = vmatprep.subr.bf16.mxu0 %v581
    %1492 = vmatpush1.bf16.msra.mxu0 %v580
    %1493 = vmatprep.subr.bf16.mxu0 %v585
    %1494 = vmatpush1.bf16.msra.mxu0 %v584
    %1495 = vmatprep.subr.bf16.mxu0 %v589
    %1496 = vmatpush1.bf16.msra.mxu0 %v588
    %1497 = vmatprep.subr.bf16.mxu0 %v593
    %1498 = vmatpush1.bf16.msra.mxu0 %v592
    %1499 = vmatprep.subr.bf16.mxu0 %v597
    %1500 = vmatpush1.bf16.msra.mxu0 %v596
    %1501 = vmatprep.subr.bf16.mxu0 %v601
    %1502 = vmatpush1.bf16.msra.mxu0 %v600
    %1503 = vmatprep.subr.bf16.mxu0 %v605
    %1504 = vmatpush1.bf16.msra.mxu0 %v604
    %1505 = vmatprep.subr.bf16.mxu0 0
    %1506 = vmatpush1.bf16.msra.mxu0 0
    %1507 = vmatprep.subr.bf16.mxu0 0
    %1508 = vmatpush1.bf16.msra.mxu0 0
    %1509 = vmatprep.subr.bf16.mxu0 0
    %1510 = vmatpush1.bf16.msra.mxu0 0
    %1511 = vmatprep.subr.bf16.mxu0 0
    %1512 = vmatpush1.bf16.msra.mxu0 0
    %1513 = vmatprep.subr.bf16.mxu0 0
    %1514 = vmatpush1.bf16.msra.mxu0 0
    %1515 = vmatprep.subr.bf16.mxu0 0
    %1516 = vmatpush1.bf16.msra.mxu0 0
    %1517 = vmatprep.subr.bf16.mxu0 0
    %1518 = vmatpush1.bf16.msra.mxu0 0
    %1519 = vmatprep.subr.bf16.mxu0 0
    %1520 = vmatpush1.bf16.msra.mxu0 0
    %1521 = vmatprep.mubr.bf16.mxu0 0
    %1522 = vmatmul.mubr.bf16.gmra.mrb[0].mxu0 %v1447
    %v1523 = vpop.f32.mrb[0].mxu0
    %v1524 = vadd.f32 0.0, %v1523
    %v1525 = vpop.f32.mrb[0].mxu0
    %v1526 = vadd.f32 0.0, %v1525
    %v1527 = vpop.f32.mrb[0].mxu0
    %v1528 = vpop.f32.mrb[0].mxu0
    %1529 = vdwg.mxu0
    %v1534 = vcombine.low %v1483, %v1485
    %v1535 = vcombine.low %v1524, %v1526
    %v1537 = vunpack.c.l.s4 1966171168
    %v1538 = vunpack.c.0.s8 %v1537
    %v1539 = vlaneseq
    %v1540 = vshrl.u32 %v1539, 7
    %v1541 = vsub.s32 %v1538, %v1540
    %v1542 = vrot.slane %v1534, %v1541
    %v1544 = vunpack.c.l.s4 1966171168
    %v1545 = vunpack.c.0.s8 %v1544
    %v1546 = vlaneseq
    %v1547 = vshrl.u32 %v1546, 7
    %v1548 = vsub.s32 %v1545, %v1547
    %v1549 = vrot.slane %v1535, %v1548
    %v1550 = vcombine.low %v1542, %v1549
    %v1552 = vunpack.c.l.s4 1966171168
    %v1553 = vunpack.c.0.s8 %v1552
    %v1554 = vlaneseq
    %v1555 = vshrl.u32 %v1554, 7
    %v1556 = vsub.s32 %v1553, %v1555
    %v1557 = vrot.slane %v1550, %v1556
    %v1559 = vadd.f32 %v1446, %v1557
    %v1560 = vxor.u32 %v1559, 2147483648
    %v1561 = vmul.f32 %v1560, 1.442695
    %v1562 = vpow.pop %v1561
    %v1563 = vadd.f32 %v1562, 1.0
    %v1564 = vrcp.pop %v1563
    %v1565 = vmul.f32 1.0, %v1564
    %v1567 = vrot.slane %v1559, 3
    %v1569 = vtanh.pop %v1567
    %v1571 = vrot.slane %v1565, 1
    %v1573 = vmul.f32 %v1571, %v1440
    %v1574 = vmul.f32 %v1565, %v1569
    %v1575 = vadd.f32 %v1573, %v1574
    %v1576 = vtanh.pop %v1575
    %v1577 = vrot.slane %v1565, 2
    %v1579 = vmul.f32 %v1577, %v1576
    %s1580 = scalar_lea.vmem [#allocation2], 7
    %v1581 = vld [vmem:[%s1580] ss:$8 sm:$0xf]
    %v1582 = vpack.c.bf16 %v1579, %v1579
    %1583 = vmatprep.subr.bf16.mxu0 %v575
    %1584 = vmatpush1.bf16.msra.mxu0 %v574
    %1585 = vmatprep.subr.bf16.mxu0 %v579
    %1586 = vmatpush1.bf16.msra.mxu0 %v578
    %1587 = vmatprep.subr.bf16.mxu0 %v583
    %1588 = vmatpush1.bf16.msra.mxu0 %v582
    %1589 = vmatprep.subr.bf16.mxu0 %v587
    %1590 = vmatpush1.bf16.msra.mxu0 %v586
    %1591 = vmatprep.subr.bf16.mxu0 %v591
    %1592 = vmatpush1.bf16.msra.mxu0 %v590
    %1593 = vmatprep.subr.bf16.mxu0 %v595
    %1594 = vmatpush1.bf16.msra.mxu0 %v594
    %1595 = vmatprep.subr.bf16.mxu0 %v599
    %1596 = vmatpush1.bf16.msra.mxu0 %v598
    %1597 = vmatprep.subr.bf16.mxu0 %v603
    %1598 = vmatpush1.bf16.msra.mxu0 %v602
    %1599 = vmatprep.subr.bf16.mxu0 0
    %1600 = vmatpush1.bf16.msra.mxu0 0
    %1601 = vmatprep.subr.bf16.mxu0 0
    %1602 = vmatpush1.bf16.msra.mxu0 0
    %1603 = vmatprep.subr.bf16.mxu0 0
    %1604 = vmatpush1.bf16.msra.mxu0 0
    %1605 = vmatprep.subr.bf16.mxu0 0
    %1606 = vmatpush1.bf16.msra.mxu0 0
    %1607 = vmatprep.subr.bf16.mxu0 0
    %1608 = vmatpush1.bf16.msra.mxu0 0
    %1609 = vmatprep.subr.bf16.mxu0 0
    %1610 = vmatpush1.bf16.msra.mxu0 0
    %1611 = vmatprep.subr.bf16.mxu0 0
    %1612 = vmatpush1.bf16.msra.mxu0 0
    %1613 = vmatprep.subr.bf16.mxu0 0
    %1614 = vmatpush1.bf16.msra.mxu0 0
    %1615 = vmatprep.mubr.bf16.mxu0 0
    %1616 = vmatmul.mubr.bf16.gmra.mrb[0].mxu0 %v1582
    %v1617 = vpop.f32.mrb[0].mxu0
    %v1618 = vadd.f32 0.0, %v1617
    %v1619 = vpop.f32.mrb[0].mxu0
    %v1620 = vadd.f32 0.0, %v1619
    %v1621 = vpop.f32.mrb[0].mxu0
    %v1622 = vpop.f32.mrb[0].mxu0
    %1623 = vdwg.mxu0
    %1624 = vmatprep.subr.bf16.mxu0 %v577
    %1625 = vmatpush1.bf16.msra.mxu0 %v576
    %1626 = vmatprep.subr.bf16.mxu0 %v581
    %1627 = vmatpush1.bf16.msra.mxu0 %v580
    %1628 = vmatprep.subr.bf16.mxu0 %v585
    %1629 = vmatpush1.bf16.msra.mxu0 %v584
    %1630 = vmatprep.subr.bf16.mxu0 %v589
    %1631 = vmatpush1.bf16.msra.mxu0 %v588
    %1632 = vmatprep.subr.bf16.mxu0 %v593
    %1633 = vmatpush1.bf16.msra.mxu0 %v592
    %1634 = vmatprep.subr.bf16.mxu0 %v597
    %1635 = vmatpush1.bf16.msra.mxu0 %v596
    %1636 = vmatprep.subr.bf16.mxu0 %v601
    %1637 = vmatpush1.bf16.msra.mxu0 %v600
    %1638 = vmatprep.subr.bf16.mxu0 %v605
    %1639 = vmatpush1.bf16.msra.mxu0 %v604
    %1640 = vmatprep.subr.bf16.mxu0 0
    %1641 = vmatpush1.bf16.msra.mxu0 0
    %1642 = vmatprep.subr.bf16.mxu0 0
    %1643 = vmatpush1.bf16.msra.mxu0 0
    %1644 = vmatprep.subr.bf16.mxu0 0
    %1645 = vmatpush1.bf16.msra.mxu0 0
    %1646 = vmatprep.subr.bf16.mxu0 0
    %1647 = vmatpush1.bf16.msra.mxu0 0
    %1648 = vmatprep.subr.bf16.mxu0 0
    %1649 = vmatpush1.bf16.msra.mxu0 0
    %1650 = vmatprep.subr.bf16.mxu0 0
    %1651 = vmatpush1.bf16.msra.mxu0 0
    %1652 = vmatprep.subr.bf16.mxu0 0
    %1653 = vmatpush1.bf16.msra.mxu0 0
    %1654 = vmatprep.subr.bf16.mxu0 0
    %1655 = vmatpush1.bf16.msra.mxu0 0
    %1656 = vmatprep.mubr.bf16.mxu0 0
    %1657 = vmatmul.mubr.bf16.gmra.mrb[0].mxu0 %v1582
    %v1658 = vpop.f32.mrb[0].mxu0
    %v1659 = vadd.f32 0.0, %v1658
    %v1660 = vpop.f32.mrb[0].mxu0
    %v1661 = vadd.f32 0.0, %v1660
    %v1662 = vpop.f32.mrb[0].mxu0
    %v1663 = vpop.f32.mrb[0].mxu0
    %1664 = vdwg.mxu0
    %v1669 = vcombine.low %v1618, %v1620
    %v1670 = vcombine.low %v1659, %v1661
    %v1672 = vunpack.c.l.s4 1966171168
    %v1673 = vunpack.c.0.s8 %v1672
    %v1674 = vlaneseq
    %v1675 = vshrl.u32 %v1674, 7
    %v1676 = vsub.s32 %v1673, %v1675
    %v1677 = vrot.slane %v1669, %v1676
    %v1679 = vunpack.c.l.s4 1966171168
    %v1680 = vunpack.c.0.s8 %v1679
    %v1681 = vlaneseq
    %v1682 = vshrl.u32 %v1681, 7
    %v1683 = vsub.s32 %v1680, %v1682
    %v1684 = vrot.slane %v1670, %v1683
    %v1685 = vcombine.low %v1677, %v1684
    %v1687 = vunpack.c.l.s4 1966171168
    %v1688 = vunpack.c.0.s8 %v1687
    %v1689 = vlaneseq
    %v1690 = vshrl.u32 %v1689, 7
    %v1691 = vsub.s32 %v1688, %v1690
    %v1692 = vrot.slane %v1685, %v1691
    %v1694 = vadd.f32 %v1581, %v1692
    %v1695 = vxor.u32 %v1694, 2147483648
    %v1696 = vmul.f32 %v1695, 1.442695
    %v1697 = vpow.pop %v1696
    %v1698 = vadd.f32 %v1697, 1.0
    %v1699 = vrcp.pop %v1698
    %v1700 = vmul.f32 1.0, %v1699
    %v1702 = vrot.slane %v1694, 3
    %v1704 = vtanh.pop %v1702
    %v1706 = vrot.slane %v1700, 1
    %v1708 = vmul.f32 %v1706, %v1575
    %v1709 = vmul.f32 %v1700, %v1704
    %v1710 = vadd.f32 %v1708, %v1709
    %v1711 = vtanh.pop %v1710
    %v1712 = vrot.slane %v1700, 2
    %v1714 = vmul.f32 %v1712, %v1711
    %v1716 = vlaneseq
    %v1717 = vshrl.u32 %v1716, 7
    %v1718 = vsub.s32 0, %v1717
    %v1719 = vrot.slane %v904, %v1718
    %v1722 = vlaneseq
    %v1723 = vshrl.u32 %v1722, 7
    %v1724 = vsub.s32 0, %v1723
    %v1725 = vrot.slane %v1039, %v1724
    %v1728 = vlaneseq
    %v1729 = vshrl.u32 %v1728, 7
    %v1730 = vsub.s32 0, %v1729
    %v1731 = vrot.slane %v1174, %v1730
    %v1734 = vlaneseq
    %v1735 = vshrl.u32 %v1734, 7
    %v1736 = vsub.s32 0, %v1735
    %v1737 = vrot.slane %v1309, %v1736
    %v1740 = vlaneseq
    %v1741 = vshrl.u32 %v1740, 7
    %v1742 = vsub.s32 0, %v1741
    %v1743 = vrot.slane %v1444, %v1742
    %v1746 = vlaneseq
    %v1747 = vshrl.u32 %v1746, 7
    %v1748 = vsub.s32 0, %v1747
    %v1749 = vrot.slane %v1579, %v1748
    %v1752 = vlaneseq
    %v1753 = vshrl.u32 %v1752, 7
    %v1754 = vsub.s32 0, %v1753
    %v1755 = vrot.slane %v1714, %v1754
    %v1757 = vsel %vm130, %v769, %v1719
    %v1758 = vsel %vm132, %v1757, %v1725
    %v1759 = vsel %vm134, %v1758, %v1731
    %v1760 = vsel %vm136, %v1759, %v1737
    %v1761 = vsel %vm138, %v1760, %v1743
    %v1762 = vsel %vm140, %v1761, %v1749
    %v1763 = vsel %vm142, %v1762, %v1755
    %v1764 = vpack.c.bf16 %v1763, %v1763
    %v1765 = vld [vmem:[#allocation11] sm:$0xf]
    %v1766 = vld [vmem:[#allocation11 + $0x4] sm:$0xf]
    %v1767 = vld [vmem:[#allocation11 + $0x8] sm:$0xf]
    %v1768 = vld [vmem:[#allocation11 + $0xc] sm:$0xf]
    %v1769 = vld [vmem:[#allocation11 + $0x10] sm:$0xf]
    %v1770 = vld [vmem:[#allocation11 + $0x14] sm:$0xf]
    %v1771 = vld [vmem:[#allocation11 + $0x18] sm:$0xf]
    %v1772 = vld [vmem:[#allocation11 + $0x1c] sm:$0xf]
    %v1773 = vld [vmem:[#allocation11 + $0x20] sm:$0xf]
    %v1774 = vld [vmem:[#allocation11 + $0x24] sm:$0xf]
    %v1775 = vld [vmem:[#allocation11 + $0x28] sm:$0xf]
    %v1776 = vld [vmem:[#allocation11 + $0x2c] sm:$0xf]
    %v1777 = vld [vmem:[#allocation11 + $0x30] sm:$0xf]
    %v1778 = vld [vmem:[#allocation11 + $0x34] sm:$0xf]
    %v1779 = vld [vmem:[#allocation11 + $0x38] sm:$0xf]
    %v1780 = vld [vmem:[#allocation11 + $0x3c] sm:$0xf]
    %v1781 = vld [vmem:[%s6] sm:$0x1]
    %v1783 = vlaneseq
    %v1784 = vshrl.u32 %v1783, 7
    %v1785 = vsub.s32 0, %v1784
    %v1786 = vrot.slane %v1781, %v1785
    %v1804 = vunpack.c.l.b16 %v1765
    %v1805 = vunpack.c.l.b16 %v1766
    %v1806 = vunpack.c.l.b16 %v1767
    %v1807 = vunpack.c.l.b16 %v1768
    %v1808 = vunpack.c.l.b16 %v1769
    %v1809 = vunpack.c.l.b16 %v1770
    %v1810 = vunpack.c.l.b16 %v1771
    %v1811 = vunpack.c.l.b16 %v1772
    %v1812 = vunpack.c.l.b16 %v1773
    %v1813 = vunpack.c.l.b16 %v1774
    %v1814 = vunpack.c.l.b16 %v1775
    %v1815 = vunpack.c.l.b16 %v1776
    %v1816 = vunpack.c.l.b16 %v1777
    %v1817 = vunpack.c.l.b16 %v1778
    %v1818 = vunpack.c.l.b16 %v1779
    %v1819 = vunpack.c.l.b16 %v1780
    %v1820 = vpack.c.b16 %v1805, %v1804
    %v1821 = vpack.c.b16 %v1807, %v1806
    %v1822 = vpack.c.b16 %v1809, %v1808
    %v1823 = vpack.c.b16 %v1811, %v1810
    %v1824 = vpack.c.b16 %v1813, %v1812
    %v1825 = vpack.c.b16 %v1815, %v1814
    %v1826 = vpack.c.b16 %v1817, %v1816
    %v1827 = vpack.c.b16 %v1819, %v1818
    %1836 = vmatprep.subr.bf16.mxu0 0
    %1837 = vmatpush1.bf16.msra.mxu0 %v1820
    %1838 = vmatprep.subr.bf16.mxu0 0
    %1839 = vmatpush1.bf16.msra.mxu0 %v1821
    %1840 = vmatprep.subr.bf16.mxu0 0
    %1841 = vmatpush1.bf16.msra.mxu0 %v1822
    %1842 = vmatprep.subr.bf16.mxu0 0
    %1843 = vmatpush1.bf16.msra.mxu0 %v1823
    %1844 = vmatprep.subr.bf16.mxu0 0
    %1845 = vmatpush1.bf16.msra.mxu0 %v1824
    %1846 = vmatprep.subr.bf16.mxu0 0
    %1847 = vmatpush1.bf16.msra.mxu0 %v1825
    %1848 = vmatprep.subr.bf16.mxu0 0
    %1849 = vmatpush1.bf16.msra.mxu0 %v1826
    %1850 = vmatprep.subr.bf16.mxu0 0
    %1851 = vmatpush1.bf16.msra.mxu0 %v1827
    %1852 = vmatprep.subr.bf16.mxu0 0
    %1853 = vmatpush1.bf16.msra.mxu0 0
    %1854 = vmatprep.subr.bf16.mxu0 0
    %1855 = vmatpush1.bf16.msra.mxu0 0
    %1856 = vmatprep.subr.bf16.mxu0 0
    %1857 = vmatpush1.bf16.msra.mxu0 0
    %1858 = vmatprep.subr.bf16.mxu0 0
    %1859 = vmatpush1.bf16.msra.mxu0 0
    %1860 = vmatprep.subr.bf16.mxu0 0
    %1861 = vmatpush1.bf16.msra.mxu0 0
    %1862 = vmatprep.subr.bf16.mxu0 0
    %1863 = vmatpush1.bf16.msra.mxu0 0
    %1864 = vmatprep.subr.bf16.mxu0 0
    %1865 = vmatpush1.bf16.msra.mxu0 0
    %1866 = vmatprep.subr.bf16.mxu0 0
    %1867 = vmatpush1.bf16.msra.mxu0 0
    %1868 = vmatprep.mubr.bf16.mxu0 0
    %1869 = vmatmul.mubr.bf16.gmra.mrb[0].mxu0 %v1764
    %v1870 = vpop.f32.mrb[0].mxu0
    %v1871 = vadd.f32 %v1786, %v1870
    %v1872 = vpop.f32.mrb[0].mxu0
    %v1873 = vpop.f32.mrb[0].mxu0
    %v1874 = vpop.f32.mrb[0].mxu0
    %1875 = vdwg.mxu0
    %1876 = vmax.xlane.f32.xlu0 %v1871
    %v1877 = vpop.xlane.xlu0 %1876
    %v1878 = vsub.f32 %v1871, %v1877
    %v1879 = vmul.f32 %v1878, 1.442695
    %v1880 = vpow.pop %v1879
    %1881 = vadd.xlane.f32.xlu0 %v1880
    %v1882 = vpop.xlane.xlu0 %1881
    %v1883 = vlog2.pop %v1882
    %v1884 = vmul.f32 %v1883, 0.6931472
    %v1885 = vsub.f32 %v1878, %v1884
    %1886 = vst [vmem:[#allocation13] sm:$0xff] %v1885
    // Predicated region
    $region42: #{lstm_tagger_forward.1} parent=1 // pred_check
      _
    $region43: #{lstm_tagger_forward.1} parent=1 // pred_check_branch
      %1888 = sbr.rel (0) target = $region45
    $region44: #{lstm_tagger_forward.1} parent=1 // pred_region
      %s1890 = ssub.s32 128, 128
      %1891 = vsyncadd [#allocation7], %s1890
      %s1893 = sshll.u32 [#allocation13], 4
      %s1894 = int_to_ptr.vmem [resolvable:$true] %s1893
      %1896 = dma.vmem_to_hbm [thread:$0]  %s1894, 128, %s7, [#allocation7]
    $region45: #{lstm_tagger_forward.1} parent=1 // pred_fallthru
      _
    // Predicated region
    $region46: #{lstm_tagger_forward.1} parent=1 // pred_check
      _
    $region47: #{lstm_tagger_forward.1} parent=1 // pred_check_branch
      %1898 = sbr.rel (0) target = $region49
    $region48: #{lstm_tagger_forward.1} parent=1 // pred_region
      %1899 = dma.done [#allocation7], 128
    $region49: #{lstm_tagger_forward.1} parent=1 // pred_fallthru
      _
    %1900 = vsyncpa [#allocation6], 1
    %1901 = vsyncpa [#allocation9], 1
    %1902 = vsyncpa [#allocation12], 1
    %1903 = vsyncpa [#allocation7], 1

</llo_original>
